<compile_context>
chip_gen: v7x
topology: tpu7x:2x2x1
jax: 0.10.0
libtpu: 0.0.40
codegen_flags: <defaults>
</compile_context>

<pallas_src>
import functools

import jax
import jax.numpy as jnp
import numpy as np
from jax import lax
from jax.experimental import pallas as pl
from jax.experimental.pallas import tpu as pltpu

KSIZE = 7
PAD = 3
_CGRP = 8  # sublane-tile-aligned channel group for the fused mean/max reduce


def _build_banded_conv_matrix(weight, H, W):
    """(1, 2, 7, 7) OIHW conv weight -> (2, H*W, H*W) f32 banded matrix.

    A[ci, p, q] = weight[0, ci, kh, kw] whenever flat input position p is the
    (kh, kw) tap of flat output position q and the tap is in-bounds.  The zero
    "same" padding and the width-wrap masks are baked in as zeros, so the
    kernel is a plain matmul: out[:, q] = sum_p feat[ci, p] * A[ci, p, q].
    """
    HW = H * W
    q = jnp.arange(HW, dtype=jnp.int32)
    r = q // W
    c = q % W
    w = weight.astype(jnp.float32)
    A = jnp.zeros((2, HW, HW), dtype=jnp.float32)
    for kh in range(KSIZE):
        for kw in range(KSIZE):
            rr = r + (kh - PAD)
            cc = c + (kw - PAD)
            valid = (rr >= 0) & (rr < H) & (cc >= 0) & (cc < W)
            p = jnp.where(valid, rr * W + cc, 0)
            for ci in range(2):
                vals = jnp.where(valid, w[0, ci, kh, kw], jnp.float32(0.0))
                A = A.at[ci, p, q].add(vals)   # invalid taps add exactly 0
    return A


def _spatial_attn_kernel(x_ref, a_ref, o_ref, *, C):
    """One grid step = one block of nb batch elements.

    x_ref : VMEM (nb, C, HW)   input block (spatial flattened -> lane dense)
    a_ref : VMEM (2, HW, HW)   banded conv matrix (constant index map -> resident)
    o_ref : VMEM (1, nb, HW)   dense output block
    """
    # ---- fused mean/max channel reduction, sublane-group reads ------------
    ce = min(_CGRP, C)
    g = x_ref[:, 0:ce, :].astype(jnp.float32)          # (nb, <=8, HW)
    ssum = jnp.sum(g, axis=1)                          # (nb, HW)
    smax = jnp.max(g, axis=1)
    for c0 in range(_CGRP, C, _CGRP):                  # static unroll over groups
        ce = min(c0 + _CGRP, C)
        g = x_ref[:, c0:ce, :].astype(jnp.float32)
        ssum = ssum + jnp.sum(g, axis=1)
        smax = jnp.maximum(smax, jnp.max(g, axis=1))
    avg = ssum * jnp.float32(1.0 / C)

    # ---- 7x7 "same" conv (2 in-ch -> 1 out-ch) as two MXU matmuls ---------
    acc = jnp.dot(avg, a_ref[0], preferred_element_type=jnp.float32,
                  precision=lax.Precision.HIGHEST)
    acc = acc + jnp.dot(smax, a_ref[1], preferred_element_type=jnp.float32,
                        precision=lax.Precision.HIGHEST)

    o_ref[0] = acc.astype(o_ref.dtype)


def spatial_attention(x, weight):
    """x: (N, C, H, W); weight: (1, 2, 7, 7) -> (N, 1, H, W)."""
    N, C, H, W = x.shape
    HW = H * W
    itemsize = jnp.dtype(x.dtype).itemsize

    # Banded conv matrix, built once in the wrapper.
    A = _build_banded_conv_matrix(weight, H, W)
    a_bytes = 2 * HW * HW * 4

    # ---- block sizing ------------------------------------------------------
    try:
        vmem_cap = int(pltpu.get_tpu_info().vmem_capacity_bytes)
    except Exception:
        vmem_cap = 64 * 1024 * 1024                     # conservative (v7x)
    vmem_budget = min(int(vmem_cap * 0.6), 48 * 1024 * 1024)

    # double-buffered input block + double-buffered output block, per batch elem
    per_batch_bytes = 2 * C * HW * itemsize + 2 * HW * itemsize
    avail = max(vmem_budget - 2 * a_bytes, per_batch_bytes)
    nb = max(1, min(N,
                    avail // per_batch_bytes,
                    16384 // max(HW, 1)))               # matmul result <= 16 f32 vregs
    if N >= 2:
        nb = min(nb, max(1, (N + 1) // 2))              # >=2 grid steps (v7x: 2 TCs)
    nb = int(nb)

    num_blocks = -(-N // nb)                            # cdiv: pad instead of nb -> 1
    N_pad = num_blocks * nb

    x_flat = x.reshape(N, C, HW)                        # lane-dense spatial slab
    if N_pad != N:
        x_flat = jnp.pad(x_flat, ((0, N_pad - N), (0, 0), (0, 0)))

    footprint = 2 * a_bytes + nb * per_batch_bytes + (2 << 20)
    vmem_limit = int(min(max(footprint, 32 * 1024 * 1024), vmem_cap))

    kernel = functools.partial(_spatial_attn_kernel, C=C)

    out = pl.pallas_call(
        kernel,
        out_shape=jax.ShapeDtypeStruct((num_blocks, nb, HW), x.dtype),
        grid_spec=pltpu.PrefetchScalarGridSpec(
            num_scalar_prefetch=0,
            grid=(num_blocks,),
            in_specs=[
                pl.BlockSpec((nb, C, HW), lambda n: (n, 0, 0)),
                pl.BlockSpec((2, HW, HW), lambda n: (0, 0, 0)),  # resident weights
            ],
            out_specs=pl.BlockSpec((1, nb, HW), lambda n: (n, 0, 0)),
        ),
        compiler_params=pltpu.CompilerParams(
            dimension_semantics=("parallel",),          # batch blocks independent
            vmem_limit_bytes=vmem_limit,
        ),
    )(x_flat, A)

    out = out.reshape(N_pad, HW)[:N]
    return out.reshape(N, 1, H, W)


def _reference(x, weight):
    """Pure-JAX reference matching the PyTorch forward."""
    avg = jnp.mean(x, axis=1, keepdims=True)
    mx = jnp.max(x, axis=1, keepdims=True)
    feat = jnp.concatenate([avg, mx], axis=1)            # (N, 2, H, W)
    return lax.conv_general_dilated(
        feat, weight,
        window_strides=(1, 1),
        padding=((PAD, PAD), (PAD, PAD)),
        dimension_numbers=("NCHW", "OIHW", "NCHW"),
    )


if __name__ == "__main__":
    key = jax.random.PRNGKey(0)
    kx, kw = jax.random.split(key)

    N, C, H, W = 2, 4, 16, 16
    x = jax.random.normal(kx, (N, C, H, W), dtype=jnp.float32)
    # Deterministic synthetic conv weight, matches nn.Conv2d(2, 1, 7): (1, 2, 7, 7)
    weight = jax.random.normal(kw, (1, 2, KSIZE, KSIZE), dtype=jnp.float32) * 0.1

    out = spatial_attention(x, weight)
    out = jax.block_until_ready(out)

    ref = _reference(x, weight)
    np.testing.assert_allclose(np.asarray(out), np.asarray(ref), rtol=1e-4, atol=1e-4)

    print("KERNEL_OK")
</pallas_src>

<mosaic_0001>
module attributes {stable_mosaic.version = 11 : i64} {
  func.func @_spatial_attn_kernel(%arg0: i32, %arg1: memref<1x4x256xf32, #tpu.memory_space<vmem>>, %arg2: memref<2x256x256xf32, #tpu.memory_space<vmem>>, %arg3: memref<1x1x256xf32, #tpu.memory_space<vmem>>) attributes {dimension_semantics = [#tpu.dimension_semantics<parallel>], iteration_bounds = array<i64: 2>, scalar_prefetch = 0 : i64, scratch_operands = 0 : i64, tpu.core_type = #tpu.core_type<tc>, window_params = [{transform_indices = @transform_0, window_bounds = array<i64: 1, 4, 256>}, {pipeline_mode = #tpu.pipeline_mode<synchronous>, transform_indices = @transform_1, window_bounds = array<i64: 2, 256, 256>}, {transform_indices = @transform_2, window_bounds = array<i64: 1, 1, 256>}]} {
    %c0 = arith.constant 0 : index
    %c0_0 = arith.constant 0 : index
    %c0_1 = arith.constant 0 : index
    %0 = vector.load %arg1[%c0, %c0_0, %c0_1] : memref<1x4x256xf32, #tpu.memory_space<vmem>>, vector<1x4x256xf32>
    %cst = arith.constant dense<0.000000e+00> : vector<1x256xf32>
    %1 = vector.multi_reduction <add>, %0, %cst [1] : vector<1x4x256xf32> to vector<1x256xf32>
    %cst_2 = arith.constant dense<0xFF800000> : vector<1x256xf32>
    %2 = vector.multi_reduction <maximumf>, %0, %cst_2 [1] : vector<1x4x256xf32> to vector<1x256xf32>
    %cst_3 = arith.constant 2.500000e-01 : f32
    %3 = vector.broadcast %cst_3 : f32 to vector<1x256xf32>
    %4 = arith.mulf %1, %3 : vector<1x256xf32>
    %c0_4 = arith.constant 0 : index
    %c0_5 = arith.constant 0 : index
    %c0_6 = arith.constant 0 : index
    %5 = vector.load %arg2[%c0_4, %c0_5, %c0_6] : memref<2x256x256xf32, #tpu.memory_space<vmem>>, vector<1x256x256xf32>
    %6 = vector.shape_cast %5 : vector<1x256x256xf32> to vector<256x256xf32>
    %cst_7 = arith.constant dense<0.000000e+00> : vector<1x256xf32>
    %7 = tpu.matmul %4, %6, %cst_7 {dimension_numbers = #tpu.dot_dimension_numbers<[1], [0], [0], [1], [0, 0, 1, 1], [], []>, precision = #tpu.contract_precision<fp32>} : vector<1x256xf32>, vector<256x256xf32>, vector<1x256xf32> -> vector<1x256xf32>
    %c1 = arith.constant 1 : index
    %c0_8 = arith.constant 0 : index
    %c0_9 = arith.constant 0 : index
    %8 = vector.load %arg2[%c1, %c0_8, %c0_9] : memref<2x256x256xf32, #tpu.memory_space<vmem>>, vector<1x256x256xf32>
    %9 = vector.shape_cast %8 : vector<1x256x256xf32> to vector<256x256xf32>
    %cst_10 = arith.constant dense<0.000000e+00> : vector<1x256xf32>
    %10 = tpu.matmul %2, %9, %cst_10 {dimension_numbers = #tpu.dot_dimension_numbers<[1], [0], [0], [1], [0, 0, 1, 1], [], []>, precision = #tpu.contract_precision<fp32>} : vector<1x256xf32>, vector<256x256xf32>, vector<1x256xf32> -> vector<1x256xf32>
    %11 = arith.addf %7, %10 : vector<1x256xf32>
    %c0_11 = arith.constant 0 : index
    %c0_12 = arith.constant 0 : index
    %c0_13 = arith.constant 0 : index
    %12 = vector.load %arg3[%c0_11, %c0_12, %c0_13] : memref<1x1x256xf32, #tpu.memory_space<vmem>>, vector<1x1x256xf32>
    %13 = vector.shape_cast %12 : vector<1x1x256xf32> to vector<1x256xf32>
    %14 = vector.shape_cast %11 : vector<1x256xf32> to vector<1x1x256xf32>
    tpu.vector_store %arg3[%c0_11, %c0_12, %c0_13], %14 {strides = array<i32>} : memref<1x1x256xf32, #tpu.memory_space<vmem>>, vector<1x1x256xf32>,
    return
  }
  func.func @transform_0(%arg0: i32) -> (i32, i32, i32) {
    %c0_i32 = arith.constant 0 : i32
    %c0_i32_0 = arith.constant 0 : i32
    %c0_i32_1 = arith.constant 0 : i32
    return %arg0, %c0_i32, %c0_i32_0 : i32, i32, i32
  }
  func.func @transform_1(%arg0: i32) -> (i32, i32, i32) {
    %c0_i32 = arith.constant 0 : i32
    %c0_i32_0 = arith.constant 0 : i32
    %c0_i32_1 = arith.constant 0 : i32
    %c0_i32_2 = arith.constant 0 : i32
    return %c0_i32, %c0_i32_0, %c0_i32_1 : i32, i32, i32
  }
  func.func @transform_2(%arg0: i32) -> (i32, i32, i32) {
    %c0_i32 = arith.constant 0 : i32
    %c0_i32_0 = arith.constant 0 : i32
    %c0_i32_1 = arith.constant 0 : i32
    return %arg0, %c0_i32, %c0_i32_0 : i32, i32, i32
  }
}

</mosaic_0001>

<llo_original>
// kernel: tpu_custom_call.1
$region0: #{tpu_custom_call.1}
  #allocation0 [shape = 'u32[]', space=smem, size = 0x4, offset = 0x4, fixed_abs, tag = 'smem constant byte address 0x4 - core index']
  #allocation1 [shape = 'u32[144,128]{1,0:T(1,128)}', space=vmem, size = 0x12000, scoped, tag = 'internal scratch']
  %s0 = inlined_call_operand.hbm [shape: f32[2,4,256], index: 0, kind: input, shape index: {}]
  %s1 = inlined_call_operand.hbm [shape: f32[2,256,256], index: 1, kind: input, shape index: {}]
  %s2 = inlined_call_operand.hbm [shape: f32[2,1,256], index: 2, kind: output, shape index: {}]
  %s3 = sld [smem:[#allocation0]]
  $region49: #{tpu_custom_call.1} parent=0
    _
  %s5 = ssub.s32 1, %s3
  %s6 = scalar_select 0, %s5, %s3
  $region1: #{tpu_custom_call.1} parent=0
    #allocation2 [shape = 'u8[8192]{0}', space=vmem, size = 0x2000, scoped, tag = 'input window, operand 0']
    #allocation3 [shape = 's32[2]{0}', space=sflag, size = 0x8, scoped, tag = 'scoped memory for tpu_custom_call.1']
    #allocation4 [shape = 's32[2]{0}', space=sflag, size = 0x8, scoped, tag = 'scoped memory for tpu_custom_call.1']
    #allocation5 [shape = 'u8[524288]{0}', space=vmem, size = 0x80000, scoped, tag = 'input window, operand 1, single buffered']
    #allocation6 [shape = 's32[1]{0}', space=sflag, size = 0x4, scoped, tag = 'scoped memory for tpu_custom_call.1']
    #allocation7 [shape = 'u8[2048]{0}', space=vmem, size = 0x800, scoped, tag = 'output window, operand 0']
    %7 = vsyncpa [#allocation3], 0
    %s8 = scalar_lea.sflag [#allocation3], 1
    %9 = vsyncpa %s8, 0
    %10 = vsyncpa [#allocation6], 0
    %11 = vsyncpa [#allocation4], 0
    %s12 = scalar_lea.sflag [#allocation4], 1
    %13 = vsyncpa %s12, 0
    loop: start=0, step=1, limit=4
    $region2: #{tpu_custom_call.1} parent=1 // loop_pre_header
      _
    $region3: #{tpu_custom_call.1} parent=1 // loop_header
      %s15 = sphi 0, %s19
      %p16 = scmp.ge.s32.totalorder %s15, 4
      %s25 = sphi 0, %s27
      %s28 = sphi 0, %s25
      %s29 = sphi 0, %s28
      %s45 = sphi 0, %s29
      %s49 = sphi 0, %s49
      %s51 = sphi 0, %s49
      %s52 = sphi 0, %s51
      %s66 = sphi 0, %s52
      %s72 = sphi 0, %s74
      %s75 = sphi 0, %s72
      %s76 = sphi 0, %s75
      %s92 = sphi 0, %s76
    $region4: #{tpu_custom_call.1} parent=1 // loop_header_branch
      %18 = sbr.rel (%p16) target = $region8
    $region5: #{tpu_custom_call.1} parent=1 // loop_body
      %s20 = ssub.s32 %s15, 1
      %s21 = ssub.s32 %s15, 2
      %s22 = sadd.s32 %s15, 1
      %s23 = ssub.s32 %s15, %s22
      %p24 = scmp.eq.s32.totalorder %s23, 0
      %s26 = sadd.s32 %s25, 1
      %s27 = scalar_select %p24, %s25, %s26
      %p30 = pneg %p24
      %p31 = scmp.eq.s32.totalorder %s15, 1
      %p32 = por %p30, %p31
      %p33 = scmp.ne.s32.totalorder %s25, %s28
      %p34 = scmp.eq.s32.totalorder %s15, 0
      %p35 = por %p33, %p34
      %p36 = scmp.ne.s32.totalorder %s25, %s28
      %p37 = scmp.eq.s32.totalorder %s20, 1
      %p38 = por %p36, %p37
      %p39 = scmp.ne.s32.totalorder %s28, %s29
      %p40 = scmp.eq.s32.totalorder %s20, 0
      %p41 = por %p39, %p40
      %p42 = scmp.ne.s32.totalorder %s28, %s29
      %p43 = scmp.eq.s32.totalorder %s21, 1
      %p44 = por %p42, %p43
      %p46 = scmp.ne.s32.totalorder %s29, %s45
      %p47 = scmp.eq.s32.totalorder %s21, 0
      %p48 = por %p46, %p47
      %s50 = sadd.s32 %s49, 1
      %p53 = scmp.eq.s32.totalorder %s15, 1
      %p54 = scmp.ne.s32.totalorder %s49, %s51
      %p55 = scmp.eq.s32.totalorder %s15, 0
      %p56 = por %p54, %p55
      %p57 = scmp.ne.s32.totalorder %s49, %s51
      %p58 = scmp.eq.s32.totalorder %s20, 1
      %p59 = por %p57, %p58
      %p60 = scmp.ne.s32.totalorder %s51, %s52
      %p61 = scmp.eq.s32.totalorder %s20, 0
      %p62 = por %p60, %p61
      %p63 = scmp.ne.s32.totalorder %s51, %s52
      %p64 = scmp.eq.s32.totalorder %s21, 1
      %p65 = por %p63, %p64
      %p67 = scmp.ne.s32.totalorder %s52, %s66
      %p68 = scmp.eq.s32.totalorder %s21, 0
      %p69 = por %p67, %p68
      %s70 = ssub.s32 %s15, %s22
      %p71 = scmp.eq.s32.totalorder %s70, 0
      %s73 = sadd.s32 %s72, 1
      %s74 = scalar_select %p71, %s72, %s73
      %p77 = pneg %p71
      %p78 = scmp.eq.s32.totalorder %s15, 1
      %p79 = por %p77, %p78
      %p80 = scmp.ne.s32.totalorder %s72, %s75
      %p81 = scmp.eq.s32.totalorder %s15, 0
      %p82 = por %p80, %p81
      %p83 = scmp.ne.s32.totalorder %s72, %s75
      %p84 = scmp.eq.s32.totalorder %s20, 1
      %p85 = por %p83, %p84
      %p86 = scmp.ne.s32.totalorder %s75, %s76
      %p87 = scmp.eq.s32.totalorder %s20, 0
      %p88 = por %p86, %p87
      %p89 = scmp.ne.s32.totalorder %s75, %s76
      %p90 = scmp.eq.s32.totalorder %s21, 1
      %p91 = por %p89, %p90
      %p93 = scmp.ne.s32.totalorder %s76, %s92
      %p94 = scmp.eq.s32.totalorder %s21, 0
      %p95 = por %p93, %p94
      %p96 = scmp.le.s32.totalorder 1, %s15
      %p97 = scmp.lt.s32.totalorder %s15, 3
      %p98 = pnand %p96, %p97
      %p99 = pneg %p98
      // Predicated region
      $region9: #{tpu_custom_call.1} parent=5 // pred_check
        _
      $region10: #{tpu_custom_call.1} parent=5 // pred_check_branch
        %101 = sbr.rel (%p98) target = $region12
      $region11: #{tpu_custom_call.1} parent=5 // pred_region
        %s102 = ssub.s32 %s15, 1
        // Predicated region
        $region13: #{tpu_custom_call.1} parent=11 // pred_check
          %p103 = pneg %p62
        $region14: #{tpu_custom_call.1} parent=11 // pred_check_branch
          %105 = sbr.rel (%p103) target = $region16
        $region15: #{tpu_custom_call.1} parent=11 // pred_region
          %s107 = ssub.s32 16384, 16384
          %108 = vsyncadd [#allocation6], %s107
          %s109 = sshll.u32 [#allocation5], 4
          %s110 = int_to_ptr.vmem [resolvable:$true] %s109
          %115 = dma.hbm_to_vmem [thread:$0]  %s1, 16384, %s110, [#allocation6], 256, 256, 16
        $region16: #{tpu_custom_call.1} parent=11 // pred_fallthru
          _
      $region12: #{tpu_custom_call.1} parent=5 // pred_fallthru
        _
      %p116 = scmp.lt.s32.totalorder %s15, 2
      // Predicated region
      $region17: #{tpu_custom_call.1} parent=5 // pred_check
        %p117 = pneg %p116
      $region18: #{tpu_custom_call.1} parent=5 // pred_check_branch
        %119 = sbr.rel (%p117) target = $region20
      $region19: #{tpu_custom_call.1} parent=5 // pred_region
        // Predicated region
        $region21: #{tpu_custom_call.1} parent=19 // pred_check
          %p120 = pneg %p35
        $region22: #{tpu_custom_call.1} parent=19 // pred_check_branch
          %122 = sbr.rel (%p120) target = $region24
        $region23: #{tpu_custom_call.1} parent=19 // pred_region
          %s123 = sand.u32 %s25, 1
          %s124 = scalar_lea.sflag [#allocation3], %s123
          %s125 = sand.u32 %s25, 1
          %s126 = smul.addr %s125, 8
          %s127 = scalar_lea.vmem [#allocation2], %s126
          %s129 = ssub.s32 128, 128
          %130 = vsyncadd %s124, %s129
          %s131 = smul.addr %s15, 2
          %s132 = smul.addr %s131, 64
          %s133 = scalar_lea.hbm %s0, %s132
          %s135 = sshll.u32 %s127, 4
          %s136 = int_to_ptr.vmem [resolvable:$true] %s135
          %138 = dma.hbm_to_vmem [thread:$0]  %s133, 128, %s136, %s124
        $region24: #{tpu_custom_call.1} parent=19 // pred_fallthru
          _
      $region20: #{tpu_custom_call.1} parent=5 // pred_fallthru
        _
      %p139 = scmp.le.s32.totalorder 1, %s15
      %p140 = scmp.lt.s32.totalorder %s15, 3
      %p141 = pnand %p139, %p140
      %p142 = pneg %p141
      // Predicated region
      $region25: #{tpu_custom_call.1} parent=5 // pred_check
        _
      $region26: #{tpu_custom_call.1} parent=5 // pred_check_branch
        %144 = sbr.rel (%p141) target = $region28
      $region27: #{tpu_custom_call.1} parent=5 // pred_region
        %s145 = ssub.s32 %s15, 1
        %s146 = sand.u32 %s28, 1
        %s147 = scalar_lea.sflag [#allocation3], %s146
        %s148 = sand.u32 %s28, 1
        %s149 = smul.addr %s148, 8
        %s150 = scalar_lea.vmem [#allocation2], %s149
        // Predicated region
        $region29: #{tpu_custom_call.1} parent=27 // pred_check
          %p151 = pneg %p41
        $region30: #{tpu_custom_call.1} parent=27 // pred_check_branch
          %153 = sbr.rel (%p151) target = $region32
        $region31: #{tpu_custom_call.1} parent=27 // pred_region
          %154 = dma.done %s147, 128
        $region32: #{tpu_custom_call.1} parent=27 // pred_fallthru
          _
        // Predicated region
        $region33: #{tpu_custom_call.1} parent=27 // pred_check
          %p155 = pneg %p62
        $region34: #{tpu_custom_call.1} parent=27 // pred_check_branch
          %157 = sbr.rel (%p155) target = $region36
        $region35: #{tpu_custom_call.1} parent=27 // pred_region
          %158 = dma.done [#allocation6], 16384
        $region36: #{tpu_custom_call.1} parent=27 // pred_fallthru
          _
        %s159 = sand.u32 %s28, 1
        %s160 = scalar_lea.sflag [#allocation3], %s159
        %s161 = sand.u32 %s28, 1
        %s162 = smul.addr %s161, 8
        %s163 = scalar_lea.vmem [#allocation2], %s162
        %p164 = pneg %p41
        %p165 = pneg %p38
        %p166 = pneg %p62
        %p167 = pneg %p59
        %p168 = pneg %p88
        %p169 = pneg %p85
        %s170 = sand.u32 %s75, 1
        %s171 = scalar_lea.sflag [#allocation4], %s170
        %s172 = sand.u32 %s75, 1
        %s173 = smul.addr %s172, 2
        %s174 = scalar_lea.vmem [#allocation7], %s173
        %v175 = vld [vmem:[%s150] sm:$0xff]
        %v177 = vcombine.high %v175, %v175
        %vm179 = vcmask 1043456
        %v180 = vsel %vm179, %v175, 0.0
        %v181 = vrot.slane %v180, 4
        %v182 = vadd.f32 %v180, %v181
        %v183 = vrot.slane %v182, 2
        %v184 = vadd.f32 %v182, %v183
        %v185 = vrot.slane %v184, 1
        %v186 = vadd.f32 %v184, %v185
        %v187 = vsel %vm179, %v177, 0.0
        %v188 = vrot.slane %v187, 4
        %v189 = vadd.f32 %v187, %v188
        %v190 = vrot.slane %v189, 2
        %v191 = vadd.f32 %v189, %v190
        %v192 = vrot.slane %v191, 1
        %v193 = vadd.f32 %v191, %v192
        %v194 = vsel %vm179, %v175, -inf
        %v195 = vrot.slane %v194, 4
        %v196 = vmax.f32 %v194, %v195
        %v197 = vrot.slane %v196, 2
        %v198 = vmax.f32 %v196, %v197
        %v199 = vrot.slane %v198, 1
        %v200 = vmax.f32 %v198, %v199
        %v201 = vsel %vm179, %v177, -inf
        %v202 = vrot.slane %v201, 4
        %v203 = vmax.f32 %v201, %v202
        %v204 = vrot.slane %v203, 2
        %v205 = vmax.f32 %v203, %v204
        %v206 = vrot.slane %v205, 1
        %v207 = vmax.f32 %v205, %v206
        %v208 = vmul.f32 %v186, 0.25
        %v209 = vmul.f32 %v193, 0.25
        %v210 = vld [vmem:[#allocation5] sm:$0xff]
        %v211 = vld [vmem:[#allocation5 + $0x8] sm:$0xff]
        %v212 = vld [vmem:[#allocation5 + $0x10] sm:$0xff]
        %v213 = vld [vmem:[#allocation5 + $0x18] sm:$0xff]
        %v214 = vld [vmem:[#allocation5 + $0x20] sm:$0xff]
        %v215 = vld [vmem:[#allocation5 + $0x28] sm:$0xff]
        %v216 = vld [vmem:[#allocation5 + $0x30] sm:$0xff]
        %v217 = vld [vmem:[#allocation5 + $0x38] sm:$0xff]
        %v218 = vld [vmem:[#allocation5 + $0x40] sm:$0xff]
        %v219 = vld [vmem:[#allocation5 + $0x48] sm:$0xff]
        %v220 = vld [vmem:[#allocation5 + $0x50] sm:$0xff]
        %v221 = vld [vmem:[#allocation5 + $0x58] sm:$0xff]
        %v222 = vld [vmem:[#allocation5 + $0x60] sm:$0xff]
        %v223 = vld [vmem:[#allocation5 + $0x68] sm:$0xff]
        %v224 = vld [vmem:[#allocation5 + $0x70] sm:$0xff]
        %v225 = vld [vmem:[#allocation5 + $0x78] sm:$0xff]
        %v226 = vld [vmem:[#allocation5 + $0x80] sm:$0xff]
        %v227 = vld [vmem:[#allocation5 + $0x88] sm:$0xff]
        %v228 = vld [vmem:[#allocation5 + $0x90] sm:$0xff]
        %v229 = vld [vmem:[#allocation5 + $0x98] sm:$0xff]
        %v230 = vld [vmem:[#allocation5 + $0xa0] sm:$0xff]
        %v231 = vld [vmem:[#allocation5 + $0xa8] sm:$0xff]
        %v232 = vld [vmem:[#allocation5 + $0xb0] sm:$0xff]
        %v233 = vld [vmem:[#allocation5 + $0xb8] sm:$0xff]
        %v234 = vld [vmem:[#allocation5 + $0xc0] sm:$0xff]
        %v235 = vld [vmem:[#allocation5 + $0xc8] sm:$0xff]
        %v236 = vld [vmem:[#allocation5 + $0xd0] sm:$0xff]
        %v237 = vld [vmem:[#allocation5 + $0xd8] sm:$0xff]
        %v238 = vld [vmem:[#allocation5 + $0xe0] sm:$0xff]
        %v239 = vld [vmem:[#allocation5 + $0xe8] sm:$0xff]
        %v240 = vld [vmem:[#allocation5 + $0xf0] sm:$0xff]
        %v241 = vld [vmem:[#allocation5 + $0xf8] sm:$0xff]
        %v242 = vld [vmem:[#allocation5 + $0x100] sm:$0xff]
        %v243 = vld [vmem:[#allocation5 + $0x108] sm:$0xff]
        %v244 = vld [vmem:[#allocation5 + $0x110] sm:$0xff]
        %v245 = vld [vmem:[#allocation5 + $0x118] sm:$0xff]
        %v246 = vld [vmem:[#allocation5 + $0x120] sm:$0xff]
        %v247 = vld [vmem:[#allocation5 + $0x128] sm:$0xff]
        %v248 = vld [vmem:[#allocation5 + $0x130] sm:$0xff]
        %v249 = vld [vmem:[#allocation5 + $0x138] sm:$0xff]
        %v250 = vld [vmem:[#allocation5 + $0x140] sm:$0xff]
        %v251 = vld [vmem:[#allocation5 + $0x148] sm:$0xff]
        %v252 = vld [vmem:[#allocation5 + $0x150] sm:$0xff]
        %v253 = vld [vmem:[#allocation5 + $0x158] sm:$0xff]
        %v254 = vld [vmem:[#allocation5 + $0x160] sm:$0xff]
        %v255 = vld [vmem:[#allocation5 + $0x168] sm:$0xff]
        %v256 = vld [vmem:[#allocation5 + $0x170] sm:$0xff]
        %v257 = vld [vmem:[#allocation5 + $0x178] sm:$0xff]
        %v258 = vld [vmem:[#allocation5 + $0x180] sm:$0xff]
        %v259 = vld [vmem:[#allocation5 + $0x188] sm:$0xff]
        %v260 = vld [vmem:[#allocation5 + $0x190] sm:$0xff]
        %v261 = vld [vmem:[#allocation5 + $0x198] sm:$0xff]
        %v262 = vld [vmem:[#allocation5 + $0x1a0] sm:$0xff]
        %v263 = vld [vmem:[#allocation5 + $0x1a8] sm:$0xff]
        %v264 = vld [vmem:[#allocation5 + $0x1b0] sm:$0xff]
        %v265 = vld [vmem:[#allocation5 + $0x1b8] sm:$0xff]
        %v266 = vld [vmem:[#allocation5 + $0x1c0] sm:$0xff]
        %v267 = vld [vmem:[#allocation5 + $0x1c8] sm:$0xff]
        %v268 = vld [vmem:[#allocation5 + $0x1d0] sm:$0xff]
        %v269 = vld [vmem:[#allocation5 + $0x1d8] sm:$0xff]
        %v270 = vld [vmem:[#allocation5 + $0x1e0] sm:$0xff]
        %v271 = vld [vmem:[#allocation5 + $0x1e8] sm:$0xff]
        %v272 = vld [vmem:[#allocation5 + $0x1f0] sm:$0xff]
        %v273 = vld [vmem:[#allocation5 + $0x1f8] sm:$0xff]
        %s274 = scalar_lea.vmem [#allocation5], 512
        %v275 = vld [vmem:[%s274] sm:$0xff]
        %v276 = vld [vmem:[%s274 + $0x8] sm:$0xff]
        %v277 = vld [vmem:[%s274 + $0x10] sm:$0xff]
        %v278 = vld [vmem:[%s274 + $0x18] sm:$0xff]
        %v279 = vld [vmem:[%s274 + $0x20] sm:$0xff]
        %v280 = vld [vmem:[%s274 + $0x28] sm:$0xff]
        %v281 = vld [vmem:[%s274 + $0x30] sm:$0xff]
        %v282 = vld [vmem:[%s274 + $0x38] sm:$0xff]
        %v283 = vld [vmem:[%s274 + $0x40] sm:$0xff]
        %v284 = vld [vmem:[%s274 + $0x48] sm:$0xff]
        %v285 = vld [vmem:[%s274 + $0x50] sm:$0xff]
        %v286 = vld [vmem:[%s274 + $0x58] sm:$0xff]
        %v287 = vld [vmem:[%s274 + $0x60] sm:$0xff]
        %v288 = vld [vmem:[%s274 + $0x68] sm:$0xff]
        %v289 = vld [vmem:[%s274 + $0x70] sm:$0xff]
        %v290 = vld [vmem:[%s274 + $0x78] sm:$0xff]
        %v291 = vld [vmem:[%s274 + $0x80] sm:$0xff]
        %v292 = vld [vmem:[%s274 + $0x88] sm:$0xff]
        %v293 = vld [vmem:[%s274 + $0x90] sm:$0xff]
        %v294 = vld [vmem:[%s274 + $0x98] sm:$0xff]
        %v295 = vld [vmem:[%s274 + $0xa0] sm:$0xff]
        %v296 = vld [vmem:[%s274 + $0xa8] sm:$0xff]
        %v297 = vld [vmem:[%s274 + $0xb0] sm:$0xff]
        %v298 = vld [vmem:[%s274 + $0xb8] sm:$0xff]
        %v299 = vld [vmem:[%s274 + $0xc0] sm:$0xff]
        %v300 = vld [vmem:[%s274 + $0xc8] sm:$0xff]
        %v301 = vld [vmem:[%s274 + $0xd0] sm:$0xff]
        %v302 = vld [vmem:[%s274 + $0xd8] sm:$0xff]
        %v303 = vld [vmem:[%s274 + $0xe0] sm:$0xff]
        %v304 = vld [vmem:[%s274 + $0xe8] sm:$0xff]
        %v305 = vld [vmem:[%s274 + $0xf0] sm:$0xff]
        %v306 = vld [vmem:[%s274 + $0xf8] sm:$0xff]
        %v307 = vld [vmem:[%s274 + $0x100] sm:$0xff]
        %v308 = vld [vmem:[%s274 + $0x108] sm:$0xff]
        %v309 = vld [vmem:[%s274 + $0x110] sm:$0xff]
        %v310 = vld [vmem:[%s274 + $0x118] sm:$0xff]
        %v311 = vld [vmem:[%s274 + $0x120] sm:$0xff]
        %v312 = vld [vmem:[%s274 + $0x128] sm:$0xff]
        %v313 = vld [vmem:[%s274 + $0x130] sm:$0xff]
        %v314 = vld [vmem:[%s274 + $0x138] sm:$0xff]
        %v315 = vld [vmem:[%s274 + $0x140] sm:$0xff]
        %v316 = vld [vmem:[%s274 + $0x148] sm:$0xff]
        %v317 = vld [vmem:[%s274 + $0x150] sm:$0xff]
        %v318 = vld [vmem:[%s274 + $0x158] sm:$0xff]
        %v319 = vld [vmem:[%s274 + $0x160] sm:$0xff]
        %v320 = vld [vmem:[%s274 + $0x168] sm:$0xff]
        %v321 = vld [vmem:[%s274 + $0x170] sm:$0xff]
        %v322 = vld [vmem:[%s274 + $0x178] sm:$0xff]
        %v323 = vld [vmem:[%s274 + $0x180] sm:$0xff]
        %v324 = vld [vmem:[%s274 + $0x188] sm:$0xff]
        %v325 = vld [vmem:[%s274 + $0x190] sm:$0xff]
        %v326 = vld [vmem:[%s274 + $0x198] sm:$0xff]
        %v327 = vld [vmem:[%s274 + $0x1a0] sm:$0xff]
        %v328 = vld [vmem:[%s274 + $0x1a8] sm:$0xff]
        %v329 = vld [vmem:[%s274 + $0x1b0] sm:$0xff]
        %v330 = vld [vmem:[%s274 + $0x1b8] sm:$0xff]
        %v331 = vld [vmem:[%s274 + $0x1c0] sm:$0xff]
        %v332 = vld [vmem:[%s274 + $0x1c8] sm:$0xff]
        %v333 = vld [vmem:[%s274 + $0x1d0] sm:$0xff]
        %v334 = vld [vmem:[%s274 + $0x1d8] sm:$0xff]
        %v335 = vld [vmem:[%s274 + $0x1e0] sm:$0xff]
        %v336 = vld [vmem:[%s274 + $0x1e8] sm:$0xff]
        %v337 = vld [vmem:[%s274 + $0x1f0] sm:$0xff]
        %v338 = vld [vmem:[%s274 + $0x1f8] sm:$0xff]
        %v339 = vand.u32 %v276, 4294901760
        %340 = vmatprep.subr.mxu0 %v339
        %v341 = vand.u32 %v275, 4294901760
        %342 = vmatpush1.msra.mxu0 %v341
        %v343 = vand.u32 %v278, 4294901760
        %344 = vmatprep.subr.mxu0 %v343
        %v345 = vand.u32 %v277, 4294901760
        %346 = vmatpush1.msra.mxu0 %v345
        %v347 = vand.u32 %v280, 4294901760
        %348 = vmatprep.subr.mxu0 %v347
        %v349 = vand.u32 %v279, 4294901760
        %350 = vmatpush1.msra.mxu0 %v349
        %v351 = vand.u32 %v282, 4294901760
        %352 = vmatprep.subr.mxu0 %v351
        %v353 = vand.u32 %v281, 4294901760
        %354 = vmatpush1.msra.mxu0 %v353
        %v355 = vand.u32 %v284, 4294901760
        %356 = vmatprep.subr.mxu0 %v355
        %v357 = vand.u32 %v283, 4294901760
        %358 = vmatpush1.msra.mxu0 %v357
        %v359 = vand.u32 %v286, 4294901760
        %360 = vmatprep.subr.mxu0 %v359
        %v361 = vand.u32 %v285, 4294901760
        %362 = vmatpush1.msra.mxu0 %v361
        %v363 = vand.u32 %v288, 4294901760
        %364 = vmatprep.subr.mxu0 %v363
        %v365 = vand.u32 %v287, 4294901760
        %366 = vmatpush1.msra.mxu0 %v365
        %v367 = vand.u32 %v290, 4294901760
        %368 = vmatprep.subr.mxu0 %v367
        %v369 = vand.u32 %v289, 4294901760
        %370 = vmatpush1.msra.mxu0 %v369
        %v371 = vand.u32 %v292, 4294901760
        %372 = vmatprep.subr.mxu0 %v371
        %v373 = vand.u32 %v291, 4294901760
        %374 = vmatpush1.msra.mxu0 %v373
        %v375 = vand.u32 %v294, 4294901760
        %376 = vmatprep.subr.mxu0 %v375
        %v377 = vand.u32 %v293, 4294901760
        %378 = vmatpush1.msra.mxu0 %v377
        %v379 = vand.u32 %v296, 4294901760
        %380 = vmatprep.subr.mxu0 %v379
        %v381 = vand.u32 %v295, 4294901760
        %382 = vmatpush1.msra.mxu0 %v381
        %v383 = vand.u32 %v298, 4294901760
        %384 = vmatprep.subr.mxu0 %v383
        %v385 = vand.u32 %v297, 4294901760
        %386 = vmatpush1.msra.mxu0 %v385
        %v387 = vand.u32 %v300, 4294901760
        %388 = vmatprep.subr.mxu0 %v387
        %v389 = vand.u32 %v299, 4294901760
        %390 = vmatpush1.msra.mxu0 %v389
        %v391 = vand.u32 %v302, 4294901760
        %392 = vmatprep.subr.mxu0 %v391
        %v393 = vand.u32 %v301, 4294901760
        %394 = vmatpush1.msra.mxu0 %v393
        %v395 = vand.u32 %v304, 4294901760
        %396 = vmatprep.subr.mxu0 %v395
        %v397 = vand.u32 %v303, 4294901760
        %398 = vmatpush1.msra.mxu0 %v397
        %v399 = vand.u32 %v306, 4294901760
        %400 = vmatprep.subr.mxu0 %v399
        %v401 = vand.u32 %v305, 4294901760
        %402 = vmatpush1.msra.mxu0 %v401
        %v403 = vand.u32 %v308, 4294901760
        %404 = vmatprep.subr.mxu0 %v403
        %v405 = vand.u32 %v307, 4294901760
        %406 = vmatpush1.msra.mxu0 %v405
        %v407 = vand.u32 %v310, 4294901760
        %408 = vmatprep.subr.mxu0 %v407
        %v409 = vand.u32 %v309, 4294901760
        %410 = vmatpush1.msra.mxu0 %v409
        %v411 = vand.u32 %v312, 4294901760
        %412 = vmatprep.subr.mxu0 %v411
        %v413 = vand.u32 %v311, 4294901760
        %414 = vmatpush1.msra.mxu0 %v413
        %v415 = vand.u32 %v314, 4294901760
        %416 = vmatprep.subr.mxu0 %v415
        %v417 = vand.u32 %v313, 4294901760
        %418 = vmatpush1.msra.mxu0 %v417
        %v419 = vand.u32 %v316, 4294901760
        %420 = vmatprep.subr.mxu0 %v419
        %v421 = vand.u32 %v315, 4294901760
        %422 = vmatpush1.msra.mxu0 %v421
        %v423 = vand.u32 %v318, 4294901760
        %424 = vmatprep.subr.mxu0 %v423
        %v425 = vand.u32 %v317, 4294901760
        %426 = vmatpush1.msra.mxu0 %v425
        %v427 = vand.u32 %v320, 4294901760
        %428 = vmatprep.subr.mxu0 %v427
        %v429 = vand.u32 %v319, 4294901760
        %430 = vmatpush1.msra.mxu0 %v429
        %v431 = vand.u32 %v322, 4294901760
        %432 = vmatprep.subr.mxu0 %v431
        %v433 = vand.u32 %v321, 4294901760
        %434 = vmatpush1.msra.mxu0 %v433
        %v435 = vand.u32 %v324, 4294901760
        %436 = vmatprep.subr.mxu0 %v435
        %v437 = vand.u32 %v323, 4294901760
        %438 = vmatpush1.msra.mxu0 %v437
        %v439 = vand.u32 %v326, 4294901760
        %440 = vmatprep.subr.mxu0 %v439
        %v441 = vand.u32 %v325, 4294901760
        %442 = vmatpush1.msra.mxu0 %v441
        %v443 = vand.u32 %v328, 4294901760
        %444 = vmatprep.subr.mxu0 %v443
        %v445 = vand.u32 %v327, 4294901760
        %446 = vmatpush1.msra.mxu0 %v445
        %v447 = vand.u32 %v330, 4294901760
        %448 = vmatprep.subr.mxu0 %v447
        %v449 = vand.u32 %v329, 4294901760
        %450 = vmatpush1.msra.mxu0 %v449
        %v451 = vand.u32 %v332, 4294901760
        %452 = vmatprep.subr.mxu0 %v451
        %v453 = vand.u32 %v331, 4294901760
        %454 = vmatpush1.msra.mxu0 %v453
        %v455 = vand.u32 %v334, 4294901760
        %456 = vmatprep.subr.mxu0 %v455
        %v457 = vand.u32 %v333, 4294901760
        %458 = vmatpush1.msra.mxu0 %v457
        %v459 = vand.u32 %v336, 4294901760
        %460 = vmatprep.subr.mxu0 %v459
        %v461 = vand.u32 %v335, 4294901760
        %462 = vmatpush1.msra.mxu0 %v461
        %v463 = vand.u32 %v338, 4294901760
        %464 = vmatprep.subr.mxu0 %v463
        %v465 = vand.u32 %v337, 4294901760
        %466 = vmatpush1.msra.mxu0 %v465
        %v467 = vand.u32 %v207, 4294901760
        %v468 = vsub.f32 %v207, %v467
        %v469 = vand.u32 %v468, 4294901760
        %v470 = vsub.f32 %v468, %v469
        %v471 = vand.u32 %v470, 4294901760
        %472 = vmatprep.mubr.f32.mxu0 %v471
        %v473 = vand.u32 %v200, 4294901760
        %v474 = vsub.f32 %v200, %v473
        %v475 = vand.u32 %v474, 4294901760
        %v476 = vsub.f32 %v474, %v475
        %v477 = vand.u32 %v476, 4294901760
        %478 = vmatmul.mubr.f32.gmra.mrb[0].mxu0 %v477
        %v479 = vpop.f32.mrb[0].mxu0
        %v480 = vadd.f32 0.0, %v479
        %v481 = vpop.f32.mrb[0].mxu0
        %v482 = vadd.f32 0.0, %v481
        %483 = vdwg.mxu0
        %v484 = vand.u32 %v276, 4294901760
        %v485 = vsub.f32 %v276, %v484
        %v486 = vand.u32 %v485, 4294901760
        %v487 = vsub.f32 %v485, %v486
        %v488 = vand.u32 %v487, 4294901760
        %489 = vmatprep.subr.mxu0 %v488
        %v490 = vand.u32 %v275, 4294901760
        %v491 = vsub.f32 %v275, %v490
        %v492 = vand.u32 %v491, 4294901760
        %v493 = vsub.f32 %v491, %v492
        %v494 = vand.u32 %v493, 4294901760
        %495 = vmatpush1.msra.mxu0 %v494
        %v496 = vand.u32 %v278, 4294901760
        %v497 = vsub.f32 %v278, %v496
        %v498 = vand.u32 %v497, 4294901760
        %v499 = vsub.f32 %v497, %v498
        %v500 = vand.u32 %v499, 4294901760
        %501 = vmatprep.subr.mxu0 %v500
        %v502 = vand.u32 %v277, 4294901760
        %v503 = vsub.f32 %v277, %v502
        %v504 = vand.u32 %v503, 4294901760
        %v505 = vsub.f32 %v503, %v504
        %v506 = vand.u32 %v505, 4294901760
        %507 = vmatpush1.msra.mxu0 %v506
        %v508 = vand.u32 %v280, 4294901760
        %v509 = vsub.f32 %v280, %v508
        %v510 = vand.u32 %v509, 4294901760
        %v511 = vsub.f32 %v509, %v510
        %v512 = vand.u32 %v511, 4294901760
        %513 = vmatprep.subr.mxu0 %v512
        %v514 = vand.u32 %v279, 4294901760
        %v515 = vsub.f32 %v279, %v514
        %v516 = vand.u32 %v515, 4294901760
        %v517 = vsub.f32 %v515, %v516
        %v518 = vand.u32 %v517, 4294901760
        %519 = vmatpush1.msra.mxu0 %v518
        %v520 = vand.u32 %v282, 4294901760
        %v521 = vsub.f32 %v282, %v520
        %v522 = vand.u32 %v521, 4294901760
        %v523 = vsub.f32 %v521, %v522
        %v524 = vand.u32 %v523, 4294901760
        %525 = vmatprep.subr.mxu0 %v524
        %v526 = vand.u32 %v281, 4294901760
        %v527 = vsub.f32 %v281, %v526
        %v528 = vand.u32 %v527, 4294901760
        %v529 = vsub.f32 %v527, %v528
        %v530 = vand.u32 %v529, 4294901760
        %531 = vmatpush1.msra.mxu0 %v530
        %v532 = vand.u32 %v284, 4294901760
        %v533 = vsub.f32 %v284, %v532
        %v534 = vand.u32 %v533, 4294901760
        %v535 = vsub.f32 %v533, %v534
        %v536 = vand.u32 %v535, 4294901760
        %537 = vmatprep.subr.mxu0 %v536
        %v538 = vand.u32 %v283, 4294901760
        %v539 = vsub.f32 %v283, %v538
        %v540 = vand.u32 %v539, 4294901760
        %v541 = vsub.f32 %v539, %v540
        %v542 = vand.u32 %v541, 4294901760
        %543 = vmatpush1.msra.mxu0 %v542
        %v544 = vand.u32 %v286, 4294901760
        %v545 = vsub.f32 %v286, %v544
        %v546 = vand.u32 %v545, 4294901760
        %v547 = vsub.f32 %v545, %v546
        %v548 = vand.u32 %v547, 4294901760
        %549 = vmatprep.subr.mxu0 %v548
        %v550 = vand.u32 %v285, 4294901760
        %v551 = vsub.f32 %v285, %v550
        %v552 = vand.u32 %v551, 4294901760
        %v553 = vsub.f32 %v551, %v552
        %v554 = vand.u32 %v553, 4294901760
        %555 = vmatpush1.msra.mxu0 %v554
        %v556 = vand.u32 %v288, 4294901760
        %v557 = vsub.f32 %v288, %v556
        %v558 = vand.u32 %v557, 4294901760
        %v559 = vsub.f32 %v557, %v558
        %v560 = vand.u32 %v559, 4294901760
        %561 = vmatprep.subr.mxu0 %v560
        %v562 = vand.u32 %v287, 4294901760
        %v563 = vsub.f32 %v287, %v562
        %v564 = vand.u32 %v563, 4294901760
        %v565 = vsub.f32 %v563, %v564
        %v566 = vand.u32 %v565, 4294901760
        %567 = vmatpush1.msra.mxu0 %v566
        %v568 = vand.u32 %v290, 4294901760
        %v569 = vsub.f32 %v290, %v568
        %v570 = vand.u32 %v569, 4294901760
        %v571 = vsub.f32 %v569, %v570
        %v572 = vand.u32 %v571, 4294901760
        %573 = vmatprep.subr.mxu0 %v572
        %v574 = vand.u32 %v289, 4294901760
        %v575 = vsub.f32 %v289, %v574
        %v576 = vand.u32 %v575, 4294901760
        %v577 = vsub.f32 %v575, %v576
        %v578 = vand.u32 %v577, 4294901760
        %579 = vmatpush1.msra.mxu0 %v578
        %v580 = vand.u32 %v292, 4294901760
        %v581 = vsub.f32 %v292, %v580
        %v582 = vand.u32 %v581, 4294901760
        %v583 = vsub.f32 %v581, %v582
        %v584 = vand.u32 %v583, 4294901760
        %585 = vmatprep.subr.mxu0 %v584
        %v586 = vand.u32 %v291, 4294901760
        %v587 = vsub.f32 %v291, %v586
        %v588 = vand.u32 %v587, 4294901760
        %v589 = vsub.f32 %v587, %v588
        %v590 = vand.u32 %v589, 4294901760
        %591 = vmatpush1.msra.mxu0 %v590
        %v592 = vand.u32 %v294, 4294901760
        %v593 = vsub.f32 %v294, %v592
        %v594 = vand.u32 %v593, 4294901760
        %v595 = vsub.f32 %v593, %v594
        %v596 = vand.u32 %v595, 4294901760
        %597 = vmatprep.subr.mxu0 %v596
        %v598 = vand.u32 %v293, 4294901760
        %v599 = vsub.f32 %v293, %v598
        %v600 = vand.u32 %v599, 4294901760
        %v601 = vsub.f32 %v599, %v600
        %v602 = vand.u32 %v601, 4294901760
        %603 = vmatpush1.msra.mxu0 %v602
        %v604 = vand.u32 %v296, 4294901760
        %v605 = vsub.f32 %v296, %v604
        %v606 = vand.u32 %v605, 4294901760
        %v607 = vsub.f32 %v605, %v606
        %v608 = vand.u32 %v607, 4294901760
        %609 = vmatprep.subr.mxu0 %v608
        %v610 = vand.u32 %v295, 4294901760
        %v611 = vsub.f32 %v295, %v610
        %v612 = vand.u32 %v611, 4294901760
        %v613 = vsub.f32 %v611, %v612
        %v614 = vand.u32 %v613, 4294901760
        %615 = vmatpush1.msra.mxu0 %v614
        %v616 = vand.u32 %v298, 4294901760
        %v617 = vsub.f32 %v298, %v616
        %v618 = vand.u32 %v617, 4294901760
        %v619 = vsub.f32 %v617, %v618
        %v620 = vand.u32 %v619, 4294901760
        %621 = vmatprep.subr.mxu0 %v620
        %v622 = vand.u32 %v297, 4294901760
        %v623 = vsub.f32 %v297, %v622
        %v624 = vand.u32 %v623, 4294901760
        %v625 = vsub.f32 %v623, %v624
        %v626 = vand.u32 %v625, 4294901760
        %627 = vmatpush1.msra.mxu0 %v626
        %v628 = vand.u32 %v300, 4294901760
        %v629 = vsub.f32 %v300, %v628
        %v630 = vand.u32 %v629, 4294901760
        %v631 = vsub.f32 %v629, %v630
        %v632 = vand.u32 %v631, 4294901760
        %633 = vmatprep.subr.mxu0 %v632
        %v634 = vand.u32 %v299, 4294901760
        %v635 = vsub.f32 %v299, %v634
        %v636 = vand.u32 %v635, 4294901760
        %v637 = vsub.f32 %v635, %v636
        %v638 = vand.u32 %v637, 4294901760
        %639 = vmatpush1.msra.mxu0 %v638
        %v640 = vand.u32 %v302, 4294901760
        %v641 = vsub.f32 %v302, %v640
        %v642 = vand.u32 %v641, 4294901760
        %v643 = vsub.f32 %v641, %v642
        %v644 = vand.u32 %v643, 4294901760
        %645 = vmatprep.subr.mxu0 %v644
        %v646 = vand.u32 %v301, 4294901760
        %v647 = vsub.f32 %v301, %v646
        %v648 = vand.u32 %v647, 4294901760
        %v649 = vsub.f32 %v647, %v648
        %v650 = vand.u32 %v649, 4294901760
        %651 = vmatpush1.msra.mxu0 %v650
        %v652 = vand.u32 %v304, 4294901760
        %v653 = vsub.f32 %v304, %v652
        %v654 = vand.u32 %v653, 4294901760
        %v655 = vsub.f32 %v653, %v654
        %v656 = vand.u32 %v655, 4294901760
        %657 = vmatprep.subr.mxu0 %v656
        %v658 = vand.u32 %v303, 4294901760
        %v659 = vsub.f32 %v303, %v658
        %v660 = vand.u32 %v659, 4294901760
        %v661 = vsub.f32 %v659, %v660
        %v662 = vand.u32 %v661, 4294901760
        %663 = vmatpush1.msra.mxu0 %v662
        %v664 = vand.u32 %v306, 4294901760
        %v665 = vsub.f32 %v306, %v664
        %v666 = vand.u32 %v665, 4294901760
        %v667 = vsub.f32 %v665, %v666
        %v668 = vand.u32 %v667, 4294901760
        %669 = vmatprep.subr.mxu0 %v668
        %v670 = vand.u32 %v305, 4294901760
        %v671 = vsub.f32 %v305, %v670
        %v672 = vand.u32 %v671, 4294901760
        %v673 = vsub.f32 %v671, %v672
        %v674 = vand.u32 %v673, 4294901760
        %675 = vmatpush1.msra.mxu0 %v674
        %v676 = vand.u32 %v308, 4294901760
        %v677 = vsub.f32 %v308, %v676
        %v678 = vand.u32 %v677, 4294901760
        %v679 = vsub.f32 %v677, %v678
        %v680 = vand.u32 %v679, 4294901760
        %681 = vmatprep.subr.mxu0 %v680
        %v682 = vand.u32 %v307, 4294901760
        %v683 = vsub.f32 %v307, %v682
        %v684 = vand.u32 %v683, 4294901760
        %v685 = vsub.f32 %v683, %v684
        %v686 = vand.u32 %v685, 4294901760
        %687 = vmatpush1.msra.mxu0 %v686
        %v688 = vand.u32 %v310, 4294901760
        %v689 = vsub.f32 %v310, %v688
        %v690 = vand.u32 %v689, 4294901760
        %v691 = vsub.f32 %v689, %v690
        %v692 = vand.u32 %v691, 4294901760
        %693 = vmatprep.subr.mxu0 %v692
        %v694 = vand.u32 %v309, 4294901760
        %v695 = vsub.f32 %v309, %v694
        %v696 = vand.u32 %v695, 4294901760
        %v697 = vsub.f32 %v695, %v696
        %v698 = vand.u32 %v697, 4294901760
        %699 = vmatpush1.msra.mxu0 %v698
        %v700 = vand.u32 %v312, 4294901760
        %v701 = vsub.f32 %v312, %v700
        %v702 = vand.u32 %v701, 4294901760
        %v703 = vsub.f32 %v701, %v702
        %v704 = vand.u32 %v703, 4294901760
        %705 = vmatprep.subr.mxu0 %v704
        %v706 = vand.u32 %v311, 4294901760
        %v707 = vsub.f32 %v311, %v706
        %v708 = vand.u32 %v707, 4294901760
        %v709 = vsub.f32 %v707, %v708
        %v710 = vand.u32 %v709, 4294901760
        %711 = vmatpush1.msra.mxu0 %v710
        %v712 = vand.u32 %v314, 4294901760
        %v713 = vsub.f32 %v314, %v712
        %v714 = vand.u32 %v713, 4294901760
        %v715 = vsub.f32 %v713, %v714
        %v716 = vand.u32 %v715, 4294901760
        %717 = vmatprep.subr.mxu0 %v716
        %v718 = vand.u32 %v313, 4294901760
        %v719 = vsub.f32 %v313, %v718
        %v720 = vand.u32 %v719, 4294901760
        %v721 = vsub.f32 %v719, %v720
        %v722 = vand.u32 %v721, 4294901760
        %723 = vmatpush1.msra.mxu0 %v722
        %v724 = vand.u32 %v316, 4294901760
        %v725 = vsub.f32 %v316, %v724
        %v726 = vand.u32 %v725, 4294901760
        %v727 = vsub.f32 %v725, %v726
        %v728 = vand.u32 %v727, 4294901760
        %729 = vmatprep.subr.mxu0 %v728
        %v730 = vand.u32 %v315, 4294901760
        %v731 = vsub.f32 %v315, %v730
        %v732 = vand.u32 %v731, 4294901760
        %v733 = vsub.f32 %v731, %v732
        %v734 = vand.u32 %v733, 4294901760
        %735 = vmatpush1.msra.mxu0 %v734
        %v736 = vand.u32 %v318, 4294901760
        %v737 = vsub.f32 %v318, %v736
        %v738 = vand.u32 %v737, 4294901760
        %v739 = vsub.f32 %v737, %v738
        %v740 = vand.u32 %v739, 4294901760
        %741 = vmatprep.subr.mxu0 %v740
        %v742 = vand.u32 %v317, 4294901760
        %v743 = vsub.f32 %v317, %v742
        %v744 = vand.u32 %v743, 4294901760
        %v745 = vsub.f32 %v743, %v744
        %v746 = vand.u32 %v745, 4294901760
        %747 = vmatpush1.msra.mxu0 %v746
        %v748 = vand.u32 %v320, 4294901760
        %v749 = vsub.f32 %v320, %v748
        %v750 = vand.u32 %v749, 4294901760
        %v751 = vsub.f32 %v749, %v750
        %v752 = vand.u32 %v751, 4294901760
        %753 = vmatprep.subr.mxu0 %v752
        %v754 = vand.u32 %v319, 4294901760
        %v755 = vsub.f32 %v319, %v754
        %v756 = vand.u32 %v755, 4294901760
        %v757 = vsub.f32 %v755, %v756
        %v758 = vand.u32 %v757, 4294901760
        %759 = vmatpush1.msra.mxu0 %v758
        %v760 = vand.u32 %v322, 4294901760
        %v761 = vsub.f32 %v322, %v760
        %v762 = vand.u32 %v761, 4294901760
        %v763 = vsub.f32 %v761, %v762
        %v764 = vand.u32 %v763, 4294901760
        %765 = vmatprep.subr.mxu0 %v764
        %v766 = vand.u32 %v321, 4294901760
        %v767 = vsub.f32 %v321, %v766
        %v768 = vand.u32 %v767, 4294901760
        %v769 = vsub.f32 %v767, %v768
        %v770 = vand.u32 %v769, 4294901760
        %771 = vmatpush1.msra.mxu0 %v770
        %v772 = vand.u32 %v324, 4294901760
        %v773 = vsub.f32 %v324, %v772
        %v774 = vand.u32 %v773, 4294901760
        %v775 = vsub.f32 %v773, %v774
        %v776 = vand.u32 %v775, 4294901760
        %777 = vmatprep.subr.mxu0 %v776
        %v778 = vand.u32 %v323, 4294901760
        %v779 = vsub.f32 %v323, %v778
        %v780 = vand.u32 %v779, 4294901760
        %v781 = vsub.f32 %v779, %v780
        %v782 = vand.u32 %v781, 4294901760
        %783 = vmatpush1.msra.mxu0 %v782
        %v784 = vand.u32 %v326, 4294901760
        %v785 = vsub.f32 %v326, %v784
        %v786 = vand.u32 %v785, 4294901760
        %v787 = vsub.f32 %v785, %v786
        %v788 = vand.u32 %v787, 4294901760
        %789 = vmatprep.subr.mxu0 %v788
        %v790 = vand.u32 %v325, 4294901760
        %v791 = vsub.f32 %v325, %v790
        %v792 = vand.u32 %v791, 4294901760
        %v793 = vsub.f32 %v791, %v792
        %v794 = vand.u32 %v793, 4294901760
        %795 = vmatpush1.msra.mxu0 %v794
        %v796 = vand.u32 %v328, 4294901760
        %v797 = vsub.f32 %v328, %v796
        %v798 = vand.u32 %v797, 4294901760
        %v799 = vsub.f32 %v797, %v798
        %v800 = vand.u32 %v799, 4294901760
        %801 = vmatprep.subr.mxu0 %v800
        %v802 = vand.u32 %v327, 4294901760
        %v803 = vsub.f32 %v327, %v802
        %v804 = vand.u32 %v803, 4294901760
        %v805 = vsub.f32 %v803, %v804
        %v806 = vand.u32 %v805, 4294901760
        %807 = vmatpush1.msra.mxu0 %v806
        %v808 = vand.u32 %v330, 4294901760
        %v809 = vsub.f32 %v330, %v808
        %v810 = vand.u32 %v809, 4294901760
        %v811 = vsub.f32 %v809, %v810
        %v812 = vand.u32 %v811, 4294901760
        %813 = vmatprep.subr.mxu0 %v812
        %v814 = vand.u32 %v329, 4294901760
        %v815 = vsub.f32 %v329, %v814
        %v816 = vand.u32 %v815, 4294901760
        %v817 = vsub.f32 %v815, %v816
        %v818 = vand.u32 %v817, 4294901760
        %819 = vmatpush1.msra.mxu0 %v818
        %v820 = vand.u32 %v332, 4294901760
        %v821 = vsub.f32 %v332, %v820
        %v822 = vand.u32 %v821, 4294901760
        %v823 = vsub.f32 %v821, %v822
        %v824 = vand.u32 %v823, 4294901760
        %825 = vmatprep.subr.mxu0 %v824
        %v826 = vand.u32 %v331, 4294901760
        %v827 = vsub.f32 %v331, %v826
        %v828 = vand.u32 %v827, 4294901760
        %v829 = vsub.f32 %v827, %v828
        %v830 = vand.u32 %v829, 4294901760
        %831 = vmatpush1.msra.mxu0 %v830
        %v832 = vand.u32 %v334, 4294901760
        %v833 = vsub.f32 %v334, %v832
        %v834 = vand.u32 %v833, 4294901760
        %v835 = vsub.f32 %v833, %v834
        %v836 = vand.u32 %v835, 4294901760
        %837 = vmatprep.subr.mxu0 %v836
        %v838 = vand.u32 %v333, 4294901760
        %v839 = vsub.f32 %v333, %v838
        %v840 = vand.u32 %v839, 4294901760
        %v841 = vsub.f32 %v839, %v840
        %v842 = vand.u32 %v841, 4294901760
        %843 = vmatpush1.msra.mxu0 %v842
        %v844 = vand.u32 %v336, 4294901760
        %v845 = vsub.f32 %v336, %v844
        %v846 = vand.u32 %v845, 4294901760
        %v847 = vsub.f32 %v845, %v846
        %v848 = vand.u32 %v847, 4294901760
        %849 = vmatprep.subr.mxu0 %v848
        %v850 = vand.u32 %v335, 4294901760
        %v851 = vsub.f32 %v335, %v850
        %v852 = vand.u32 %v851, 4294901760
        %v853 = vsub.f32 %v851, %v852
        %v854 = vand.u32 %v853, 4294901760
        %855 = vmatpush1.msra.mxu0 %v854
        %v856 = vand.u32 %v338, 4294901760
        %v857 = vsub.f32 %v338, %v856
        %v858 = vand.u32 %v857, 4294901760
        %v859 = vsub.f32 %v857, %v858
        %v860 = vand.u32 %v859, 4294901760
        %861 = vmatprep.subr.mxu0 %v860
        %v862 = vand.u32 %v337, 4294901760
        %v863 = vsub.f32 %v337, %v862
        %v864 = vand.u32 %v863, 4294901760
        %v865 = vsub.f32 %v863, %v864
        %v866 = vand.u32 %v865, 4294901760
        %867 = vmatpush1.msra.mxu0 %v866
        %v868 = vand.u32 %v207, 4294901760
        %869 = vmatprep.mubr.f32.mxu0 %v868
        %v870 = vand.u32 %v200, 4294901760
        %871 = vmatmul.mubr.f32.gmra.mrb[0].mxu0 %v870
        %v872 = vpop.f32.mrb[0].mxu0
        %v873 = vadd.f32 %v480, %v872
        %v874 = vpop.f32.mrb[0].mxu0
        %v875 = vadd.f32 %v482, %v874
        %876 = vdwg.mxu0
        %v877 = vand.u32 %v276, 4294901760
        %v878 = vsub.f32 %v276, %v877
        %879 = vmatprep.subr.mxu0 %v878
        %v880 = vand.u32 %v275, 4294901760
        %v881 = vsub.f32 %v275, %v880
        %882 = vmatpush1.msra.mxu0 %v881
        %v883 = vand.u32 %v278, 4294901760
        %v884 = vsub.f32 %v278, %v883
        %885 = vmatprep.subr.mxu0 %v884
        %v886 = vand.u32 %v277, 4294901760
        %v887 = vsub.f32 %v277, %v886
        %888 = vmatpush1.msra.mxu0 %v887
        %v889 = vand.u32 %v280, 4294901760
        %v890 = vsub.f32 %v280, %v889
        %891 = vmatprep.subr.mxu0 %v890
        %v892 = vand.u32 %v279, 4294901760
        %v893 = vsub.f32 %v279, %v892
        %894 = vmatpush1.msra.mxu0 %v893
        %v895 = vand.u32 %v282, 4294901760
        %v896 = vsub.f32 %v282, %v895
        %897 = vmatprep.subr.mxu0 %v896
        %v898 = vand.u32 %v281, 4294901760
        %v899 = vsub.f32 %v281, %v898
        %900 = vmatpush1.msra.mxu0 %v899
        %v901 = vand.u32 %v284, 4294901760
        %v902 = vsub.f32 %v284, %v901
        %903 = vmatprep.subr.mxu0 %v902
        %v904 = vand.u32 %v283, 4294901760
        %v905 = vsub.f32 %v283, %v904
        %906 = vmatpush1.msra.mxu0 %v905
        %v907 = vand.u32 %v286, 4294901760
        %v908 = vsub.f32 %v286, %v907
        %909 = vmatprep.subr.mxu0 %v908
        %v910 = vand.u32 %v285, 4294901760
        %v911 = vsub.f32 %v285, %v910
        %912 = vmatpush1.msra.mxu0 %v911
        %v913 = vand.u32 %v288, 4294901760
        %v914 = vsub.f32 %v288, %v913
        %915 = vmatprep.subr.mxu0 %v914
        %v916 = vand.u32 %v287, 4294901760
        %v917 = vsub.f32 %v287, %v916
        %918 = vmatpush1.msra.mxu0 %v917
        %v919 = vand.u32 %v290, 4294901760
        %v920 = vsub.f32 %v290, %v919
        %921 = vmatprep.subr.mxu0 %v920
        %v922 = vand.u32 %v289, 4294901760
        %v923 = vsub.f32 %v289, %v922
        %924 = vmatpush1.msra.mxu0 %v923
        %v925 = vand.u32 %v292, 4294901760
        %v926 = vsub.f32 %v292, %v925
        %927 = vmatprep.subr.mxu0 %v926
        %v928 = vand.u32 %v291, 4294901760
        %v929 = vsub.f32 %v291, %v928
        %930 = vmatpush1.msra.mxu0 %v929
        %v931 = vand.u32 %v294, 4294901760
        %v932 = vsub.f32 %v294, %v931
        %933 = vmatprep.subr.mxu0 %v932
        %v934 = vand.u32 %v293, 4294901760
        %v935 = vsub.f32 %v293, %v934
        %936 = vmatpush1.msra.mxu0 %v935
        %v937 = vand.u32 %v296, 4294901760
        %v938 = vsub.f32 %v296, %v937
        %939 = vmatprep.subr.mxu0 %v938
        %v940 = vand.u32 %v295, 4294901760
        %v941 = vsub.f32 %v295, %v940
        %942 = vmatpush1.msra.mxu0 %v941
        %v943 = vand.u32 %v298, 4294901760
        %v944 = vsub.f32 %v298, %v943
        %945 = vmatprep.subr.mxu0 %v944
        %v946 = vand.u32 %v297, 4294901760
        %v947 = vsub.f32 %v297, %v946
        %948 = vmatpush1.msra.mxu0 %v947
        %v949 = vand.u32 %v300, 4294901760
        %v950 = vsub.f32 %v300, %v949
        %951 = vmatprep.subr.mxu0 %v950
        %v952 = vand.u32 %v299, 4294901760
        %v953 = vsub.f32 %v299, %v952
        %954 = vmatpush1.msra.mxu0 %v953
        %v955 = vand.u32 %v302, 4294901760
        %v956 = vsub.f32 %v302, %v955
        %957 = vmatprep.subr.mxu0 %v956
        %v958 = vand.u32 %v301, 4294901760
        %v959 = vsub.f32 %v301, %v958
        %960 = vmatpush1.msra.mxu0 %v959
        %v961 = vand.u32 %v304, 4294901760
        %v962 = vsub.f32 %v304, %v961
        %963 = vmatprep.subr.mxu0 %v962
        %v964 = vand.u32 %v303, 4294901760
        %v965 = vsub.f32 %v303, %v964
        %966 = vmatpush1.msra.mxu0 %v965
        %v967 = vand.u32 %v306, 4294901760
        %v968 = vsub.f32 %v306, %v967
        %969 = vmatprep.subr.mxu0 %v968
        %v970 = vand.u32 %v305, 4294901760
        %v971 = vsub.f32 %v305, %v970
        %972 = vmatpush1.msra.mxu0 %v971
        %v973 = vand.u32 %v308, 4294901760
        %v974 = vsub.f32 %v308, %v973
        %975 = vmatprep.subr.mxu0 %v974
        %v976 = vand.u32 %v307, 4294901760
        %v977 = vsub.f32 %v307, %v976
        %978 = vmatpush1.msra.mxu0 %v977
        %v979 = vand.u32 %v310, 4294901760
        %v980 = vsub.f32 %v310, %v979
        %981 = vmatprep.subr.mxu0 %v980
        %v982 = vand.u32 %v309, 4294901760
        %v983 = vsub.f32 %v309, %v982
        %984 = vmatpush1.msra.mxu0 %v983
        %v985 = vand.u32 %v312, 4294901760
        %v986 = vsub.f32 %v312, %v985
        %987 = vmatprep.subr.mxu0 %v986
        %v988 = vand.u32 %v311, 4294901760
        %v989 = vsub.f32 %v311, %v988
        %990 = vmatpush1.msra.mxu0 %v989
        %v991 = vand.u32 %v314, 4294901760
        %v992 = vsub.f32 %v314, %v991
        %993 = vmatprep.subr.mxu0 %v992
        %v994 = vand.u32 %v313, 4294901760
        %v995 = vsub.f32 %v313, %v994
        %996 = vmatpush1.msra.mxu0 %v995
        %v997 = vand.u32 %v316, 4294901760
        %v998 = vsub.f32 %v316, %v997
        %999 = vmatprep.subr.mxu0 %v998
        %v1000 = vand.u32 %v315, 4294901760
        %v1001 = vsub.f32 %v315, %v1000
        %1002 = vmatpush1.msra.mxu0 %v1001
        %v1003 = vand.u32 %v318, 4294901760
        %v1004 = vsub.f32 %v318, %v1003
        %1005 = vmatprep.subr.mxu0 %v1004
        %v1006 = vand.u32 %v317, 4294901760
        %v1007 = vsub.f32 %v317, %v1006
        %1008 = vmatpush1.msra.mxu0 %v1007
        %v1009 = vand.u32 %v320, 4294901760
        %v1010 = vsub.f32 %v320, %v1009
        %1011 = vmatprep.subr.mxu0 %v1010
        %v1012 = vand.u32 %v319, 4294901760
        %v1013 = vsub.f32 %v319, %v1012
        %1014 = vmatpush1.msra.mxu0 %v1013
        %v1015 = vand.u32 %v322, 4294901760
        %v1016 = vsub.f32 %v322, %v1015
        %1017 = vmatprep.subr.mxu0 %v1016
        %v1018 = vand.u32 %v321, 4294901760
        %v1019 = vsub.f32 %v321, %v1018
        %1020 = vmatpush1.msra.mxu0 %v1019
        %v1021 = vand.u32 %v324, 4294901760
        %v1022 = vsub.f32 %v324, %v1021
        %1023 = vmatprep.subr.mxu0 %v1022
        %v1024 = vand.u32 %v323, 4294901760
        %v1025 = vsub.f32 %v323, %v1024
        %1026 = vmatpush1.msra.mxu0 %v1025
        %v1027 = vand.u32 %v326, 4294901760
        %v1028 = vsub.f32 %v326, %v1027
        %1029 = vmatprep.subr.mxu0 %v1028
        %v1030 = vand.u32 %v325, 4294901760
        %v1031 = vsub.f32 %v325, %v1030
        %1032 = vmatpush1.msra.mxu0 %v1031
        %v1033 = vand.u32 %v328, 4294901760
        %v1034 = vsub.f32 %v328, %v1033
        %1035 = vmatprep.subr.mxu0 %v1034
        %v1036 = vand.u32 %v327, 4294901760
        %v1037 = vsub.f32 %v327, %v1036
        %1038 = vmatpush1.msra.mxu0 %v1037
        %v1039 = vand.u32 %v330, 4294901760
        %v1040 = vsub.f32 %v330, %v1039
        %1041 = vmatprep.subr.mxu0 %v1040
        %v1042 = vand.u32 %v329, 4294901760
        %v1043 = vsub.f32 %v329, %v1042
        %1044 = vmatpush1.msra.mxu0 %v1043
        %v1045 = vand.u32 %v332, 4294901760
        %v1046 = vsub.f32 %v332, %v1045
        %1047 = vmatprep.subr.mxu0 %v1046
        %v1048 = vand.u32 %v331, 4294901760
        %v1049 = vsub.f32 %v331, %v1048
        %1050 = vmatpush1.msra.mxu0 %v1049
        %v1051 = vand.u32 %v334, 4294901760
        %v1052 = vsub.f32 %v334, %v1051
        %1053 = vmatprep.subr.mxu0 %v1052
        %v1054 = vand.u32 %v333, 4294901760
        %v1055 = vsub.f32 %v333, %v1054
        %1056 = vmatpush1.msra.mxu0 %v1055
        %v1057 = vand.u32 %v336, 4294901760
        %v1058 = vsub.f32 %v336, %v1057
        %1059 = vmatprep.subr.mxu0 %v1058
        %v1060 = vand.u32 %v335, 4294901760
        %v1061 = vsub.f32 %v335, %v1060
        %1062 = vmatpush1.msra.mxu0 %v1061
        %v1063 = vand.u32 %v338, 4294901760
        %v1064 = vsub.f32 %v338, %v1063
        %1065 = vmatprep.subr.mxu0 %v1064
        %v1066 = vand.u32 %v337, 4294901760
        %v1067 = vsub.f32 %v337, %v1066
        %1068 = vmatpush1.msra.mxu0 %v1067
        %v1069 = vand.u32 %v207, 4294901760
        %v1070 = vsub.f32 %v207, %v1069
        %1071 = vmatprep.mubr.f32.mxu0 %v1070
        %v1072 = vand.u32 %v200, 4294901760
        %v1073 = vsub.f32 %v200, %v1072
        %1074 = vmatmul.mubr.f32.gmra.mrb[0].mxu0 %v1073
        %v1075 = vpop.f32.mrb[0].mxu0
        %v1076 = vadd.f32 %v873, %v1075
        %v1077 = vpop.f32.mrb[0].mxu0
        %v1078 = vadd.f32 %v875, %v1077
        %1079 = vdwg.mxu0
        %v1080 = vand.u32 %v276, 4294901760
        %1081 = vmatprep.subr.mxu0 %v1080
        %v1082 = vand.u32 %v275, 4294901760
        %1083 = vmatpush1.msra.mxu0 %v1082
        %v1084 = vand.u32 %v278, 4294901760
        %1085 = vmatprep.subr.mxu0 %v1084
        %v1086 = vand.u32 %v277, 4294901760
        %1087 = vmatpush1.msra.mxu0 %v1086
        %v1088 = vand.u32 %v280, 4294901760
        %1089 = vmatprep.subr.mxu0 %v1088
        %v1090 = vand.u32 %v279, 4294901760
        %1091 = vmatpush1.msra.mxu0 %v1090
        %v1092 = vand.u32 %v282, 4294901760
        %1093 = vmatprep.subr.mxu0 %v1092
        %v1094 = vand.u32 %v281, 4294901760
        %1095 = vmatpush1.msra.mxu0 %v1094
        %v1096 = vand.u32 %v284, 4294901760
        %1097 = vmatprep.subr.mxu0 %v1096
        %v1098 = vand.u32 %v283, 4294901760
        %1099 = vmatpush1.msra.mxu0 %v1098
        %v1100 = vand.u32 %v286, 4294901760
        %1101 = vmatprep.subr.mxu0 %v1100
        %v1102 = vand.u32 %v285, 4294901760
        %1103 = vmatpush1.msra.mxu0 %v1102
        %v1104 = vand.u32 %v288, 4294901760
        %1105 = vmatprep.subr.mxu0 %v1104
        %v1106 = vand.u32 %v287, 4294901760
        %1107 = vmatpush1.msra.mxu0 %v1106
        %v1108 = vand.u32 %v290, 4294901760
        %1109 = vmatprep.subr.mxu0 %v1108
        %v1110 = vand.u32 %v289, 4294901760
        %1111 = vmatpush1.msra.mxu0 %v1110
        %v1112 = vand.u32 %v292, 4294901760
        %1113 = vmatprep.subr.mxu0 %v1112
        %v1114 = vand.u32 %v291, 4294901760
        %1115 = vmatpush1.msra.mxu0 %v1114
        %v1116 = vand.u32 %v294, 4294901760
        %1117 = vmatprep.subr.mxu0 %v1116
        %v1118 = vand.u32 %v293, 4294901760
        %1119 = vmatpush1.msra.mxu0 %v1118
        %v1120 = vand.u32 %v296, 4294901760
        %1121 = vmatprep.subr.mxu0 %v1120
        %v1122 = vand.u32 %v295, 4294901760
        %1123 = vmatpush1.msra.mxu0 %v1122
        %v1124 = vand.u32 %v298, 4294901760
        %1125 = vmatprep.subr.mxu0 %v1124
        %v1126 = vand.u32 %v297, 4294901760
        %1127 = vmatpush1.msra.mxu0 %v1126
        %v1128 = vand.u32 %v300, 4294901760
        %1129 = vmatprep.subr.mxu0 %v1128
        %v1130 = vand.u32 %v299, 4294901760
        %1131 = vmatpush1.msra.mxu0 %v1130
        %v1132 = vand.u32 %v302, 4294901760
        %1133 = vmatprep.subr.mxu0 %v1132
        %v1134 = vand.u32 %v301, 4294901760
        %1135 = vmatpush1.msra.mxu0 %v1134
        %v1136 = vand.u32 %v304, 4294901760
        %1137 = vmatprep.subr.mxu0 %v1136
        %v1138 = vand.u32 %v303, 4294901760
        %1139 = vmatpush1.msra.mxu0 %v1138
        %v1140 = vand.u32 %v306, 4294901760
        %1141 = vmatprep.subr.mxu0 %v1140
        %v1142 = vand.u32 %v305, 4294901760
        %1143 = vmatpush1.msra.mxu0 %v1142
        %v1144 = vand.u32 %v308, 4294901760
        %1145 = vmatprep.subr.mxu0 %v1144
        %v1146 = vand.u32 %v307, 4294901760
        %1147 = vmatpush1.msra.mxu0 %v1146
        %v1148 = vand.u32 %v310, 4294901760
        %1149 = vmatprep.subr.mxu0 %v1148
        %v1150 = vand.u32 %v309, 4294901760
        %1151 = vmatpush1.msra.mxu0 %v1150
        %v1152 = vand.u32 %v312, 4294901760
        %1153 = vmatprep.subr.mxu0 %v1152
        %v1154 = vand.u32 %v311, 4294901760
        %1155 = vmatpush1.msra.mxu0 %v1154
        %v1156 = vand.u32 %v314, 4294901760
        %1157 = vmatprep.subr.mxu0 %v1156
        %v1158 = vand.u32 %v313, 4294901760
        %1159 = vmatpush1.msra.mxu0 %v1158
        %v1160 = vand.u32 %v316, 4294901760
        %1161 = vmatprep.subr.mxu0 %v1160
        %v1162 = vand.u32 %v315, 4294901760
        %1163 = vmatpush1.msra.mxu0 %v1162
        %v1164 = vand.u32 %v318, 4294901760
        %1165 = vmatprep.subr.mxu0 %v1164
        %v1166 = vand.u32 %v317, 4294901760
        %1167 = vmatpush1.msra.mxu0 %v1166
        %v1168 = vand.u32 %v320, 4294901760
        %1169 = vmatprep.subr.mxu0 %v1168
        %v1170 = vand.u32 %v319, 4294901760
        %1171 = vmatpush1.msra.mxu0 %v1170
        %v1172 = vand.u32 %v322, 4294901760
        %1173 = vmatprep.subr.mxu0 %v1172
        %v1174 = vand.u32 %v321, 4294901760
        %1175 = vmatpush1.msra.mxu0 %v1174
        %v1176 = vand.u32 %v324, 4294901760
        %1177 = vmatprep.subr.mxu0 %v1176
        %v1178 = vand.u32 %v323, 4294901760
        %1179 = vmatpush1.msra.mxu0 %v1178
        %v1180 = vand.u32 %v326, 4294901760
        %1181 = vmatprep.subr.mxu0 %v1180
        %v1182 = vand.u32 %v325, 4294901760
        %1183 = vmatpush1.msra.mxu0 %v1182
        %v1184 = vand.u32 %v328, 4294901760
        %1185 = vmatprep.subr.mxu0 %v1184
        %v1186 = vand.u32 %v327, 4294901760
        %1187 = vmatpush1.msra.mxu0 %v1186
        %v1188 = vand.u32 %v330, 4294901760
        %1189 = vmatprep.subr.mxu0 %v1188
        %v1190 = vand.u32 %v329, 4294901760
        %1191 = vmatpush1.msra.mxu0 %v1190
        %v1192 = vand.u32 %v332, 4294901760
        %1193 = vmatprep.subr.mxu0 %v1192
        %v1194 = vand.u32 %v331, 4294901760
        %1195 = vmatpush1.msra.mxu0 %v1194
        %v1196 = vand.u32 %v334, 4294901760
        %1197 = vmatprep.subr.mxu0 %v1196
        %v1198 = vand.u32 %v333, 4294901760
        %1199 = vmatpush1.msra.mxu0 %v1198
        %v1200 = vand.u32 %v336, 4294901760
        %1201 = vmatprep.subr.mxu0 %v1200
        %v1202 = vand.u32 %v335, 4294901760
        %1203 = vmatpush1.msra.mxu0 %v1202
        %v1204 = vand.u32 %v338, 4294901760
        %1205 = vmatprep.subr.mxu0 %v1204
        %v1206 = vand.u32 %v337, 4294901760
        %1207 = vmatpush1.msra.mxu0 %v1206
        %v1208 = vand.u32 %v207, 4294901760
        %v1209 = vsub.f32 %v207, %v1208
        %v1210 = vand.u32 %v1209, 4294901760
        %1211 = vmatprep.mubr.f32.mxu0 %v1210
        %v1212 = vand.u32 %v200, 4294901760
        %v1213 = vsub.f32 %v200, %v1212
        %v1214 = vand.u32 %v1213, 4294901760
        %1215 = vmatmul.mubr.f32.gmra.mrb[0].mxu0 %v1214
        %v1216 = vpop.f32.mrb[0].mxu0
        %v1217 = vadd.f32 %v1076, %v1216
        %v1218 = vpop.f32.mrb[0].mxu0
        %v1219 = vadd.f32 %v1078, %v1218
        %1220 = vdwg.mxu0
        %v1221 = vand.u32 %v276, 4294901760
        %v1222 = vsub.f32 %v276, %v1221
        %v1223 = vand.u32 %v1222, 4294901760
        %1224 = vmatprep.subr.mxu0 %v1223
        %v1225 = vand.u32 %v275, 4294901760
        %v1226 = vsub.f32 %v275, %v1225
        %v1227 = vand.u32 %v1226, 4294901760
        %1228 = vmatpush1.msra.mxu0 %v1227
        %v1229 = vand.u32 %v278, 4294901760
        %v1230 = vsub.f32 %v278, %v1229
        %v1231 = vand.u32 %v1230, 4294901760
        %1232 = vmatprep.subr.mxu0 %v1231
        %v1233 = vand.u32 %v277, 4294901760
        %v1234 = vsub.f32 %v277, %v1233
        %v1235 = vand.u32 %v1234, 4294901760
        %1236 = vmatpush1.msra.mxu0 %v1235
        %v1237 = vand.u32 %v280, 4294901760
        %v1238 = vsub.f32 %v280, %v1237
        %v1239 = vand.u32 %v1238, 4294901760
        %1240 = vmatprep.subr.mxu0 %v1239
        %v1241 = vand.u32 %v279, 4294901760
        %v1242 = vsub.f32 %v279, %v1241
        %v1243 = vand.u32 %v1242, 4294901760
        %1244 = vmatpush1.msra.mxu0 %v1243
        %v1245 = vand.u32 %v282, 4294901760
        %v1246 = vsub.f32 %v282, %v1245
        %v1247 = vand.u32 %v1246, 4294901760
        %1248 = vmatprep.subr.mxu0 %v1247
        %v1249 = vand.u32 %v281, 4294901760
        %v1250 = vsub.f32 %v281, %v1249
        %v1251 = vand.u32 %v1250, 4294901760
        %1252 = vmatpush1.msra.mxu0 %v1251
        %v1253 = vand.u32 %v284, 4294901760
        %v1254 = vsub.f32 %v284, %v1253
        %v1255 = vand.u32 %v1254, 4294901760
        %1256 = vmatprep.subr.mxu0 %v1255
        %v1257 = vand.u32 %v283, 4294901760
        %v1258 = vsub.f32 %v283, %v1257
        %v1259 = vand.u32 %v1258, 4294901760
        %1260 = vmatpush1.msra.mxu0 %v1259
        %v1261 = vand.u32 %v286, 4294901760
        %v1262 = vsub.f32 %v286, %v1261
        %v1263 = vand.u32 %v1262, 4294901760
        %1264 = vmatprep.subr.mxu0 %v1263
        %v1265 = vand.u32 %v285, 4294901760
        %v1266 = vsub.f32 %v285, %v1265
        %v1267 = vand.u32 %v1266, 4294901760
        %1268 = vmatpush1.msra.mxu0 %v1267
        %v1269 = vand.u32 %v288, 4294901760
        %v1270 = vsub.f32 %v288, %v1269
        %v1271 = vand.u32 %v1270, 4294901760
        %1272 = vmatprep.subr.mxu0 %v1271
        %v1273 = vand.u32 %v287, 4294901760
        %v1274 = vsub.f32 %v287, %v1273
        %v1275 = vand.u32 %v1274, 4294901760
        %1276 = vmatpush1.msra.mxu0 %v1275
        %v1277 = vand.u32 %v290, 4294901760
        %v1278 = vsub.f32 %v290, %v1277
        %v1279 = vand.u32 %v1278, 4294901760
        %1280 = vmatprep.subr.mxu0 %v1279
        %v1281 = vand.u32 %v289, 4294901760
        %v1282 = vsub.f32 %v289, %v1281
        %v1283 = vand.u32 %v1282, 4294901760
        %1284 = vmatpush1.msra.mxu0 %v1283
        %v1285 = vand.u32 %v292, 4294901760
        %v1286 = vsub.f32 %v292, %v1285
        %v1287 = vand.u32 %v1286, 4294901760
        %1288 = vmatprep.subr.mxu0 %v1287
        %v1289 = vand.u32 %v291, 4294901760
        %v1290 = vsub.f32 %v291, %v1289
        %v1291 = vand.u32 %v1290, 4294901760
        %1292 = vmatpush1.msra.mxu0 %v1291
        %v1293 = vand.u32 %v294, 4294901760
        %v1294 = vsub.f32 %v294, %v1293
        %v1295 = vand.u32 %v1294, 4294901760
        %1296 = vmatprep.subr.mxu0 %v1295
        %v1297 = vand.u32 %v293, 4294901760
        %v1298 = vsub.f32 %v293, %v1297
        %v1299 = vand.u32 %v1298, 4294901760
        %1300 = vmatpush1.msra.mxu0 %v1299
        %v1301 = vand.u32 %v296, 4294901760
        %v1302 = vsub.f32 %v296, %v1301
        %v1303 = vand.u32 %v1302, 4294901760
        %1304 = vmatprep.subr.mxu0 %v1303
        %v1305 = vand.u32 %v295, 4294901760
        %v1306 = vsub.f32 %v295, %v1305
        %v1307 = vand.u32 %v1306, 4294901760
        %1308 = vmatpush1.msra.mxu0 %v1307
        %v1309 = vand.u32 %v298, 4294901760
        %v1310 = vsub.f32 %v298, %v1309
        %v1311 = vand.u32 %v1310, 4294901760
        %1312 = vmatprep.subr.mxu0 %v1311
        %v1313 = vand.u32 %v297, 4294901760
        %v1314 = vsub.f32 %v297, %v1313
        %v1315 = vand.u32 %v1314, 4294901760
        %1316 = vmatpush1.msra.mxu0 %v1315
        %v1317 = vand.u32 %v300, 4294901760
        %v1318 = vsub.f32 %v300, %v1317
        %v1319 = vand.u32 %v1318, 4294901760
        %1320 = vmatprep.subr.mxu0 %v1319
        %v1321 = vand.u32 %v299, 4294901760
        %v1322 = vsub.f32 %v299, %v1321
        %v1323 = vand.u32 %v1322, 4294901760
        %1324 = vmatpush1.msra.mxu0 %v1323
        %v1325 = vand.u32 %v302, 4294901760
        %v1326 = vsub.f32 %v302, %v1325
        %v1327 = vand.u32 %v1326, 4294901760
        %1328 = vmatprep.subr.mxu0 %v1327
        %v1329 = vand.u32 %v301, 4294901760
        %v1330 = vsub.f32 %v301, %v1329
        %v1331 = vand.u32 %v1330, 4294901760
        %1332 = vmatpush1.msra.mxu0 %v1331
        %v1333 = vand.u32 %v304, 4294901760
        %v1334 = vsub.f32 %v304, %v1333
        %v1335 = vand.u32 %v1334, 4294901760
        %1336 = vmatprep.subr.mxu0 %v1335
        %v1337 = vand.u32 %v303, 4294901760
        %v1338 = vsub.f32 %v303, %v1337
        %v1339 = vand.u32 %v1338, 4294901760
        %1340 = vmatpush1.msra.mxu0 %v1339
        %v1341 = vand.u32 %v306, 4294901760
        %v1342 = vsub.f32 %v306, %v1341
        %v1343 = vand.u32 %v1342, 4294901760
        %1344 = vmatprep.subr.mxu0 %v1343
        %v1345 = vand.u32 %v305, 4294901760
        %v1346 = vsub.f32 %v305, %v1345
        %v1347 = vand.u32 %v1346, 4294901760
        %1348 = vmatpush1.msra.mxu0 %v1347
        %v1349 = vand.u32 %v308, 4294901760
        %v1350 = vsub.f32 %v308, %v1349
        %v1351 = vand.u32 %v1350, 4294901760
        %1352 = vmatprep.subr.mxu0 %v1351
        %v1353 = vand.u32 %v307, 4294901760
        %v1354 = vsub.f32 %v307, %v1353
        %v1355 = vand.u32 %v1354, 4294901760
        %1356 = vmatpush1.msra.mxu0 %v1355
        %v1357 = vand.u32 %v310, 4294901760
        %v1358 = vsub.f32 %v310, %v1357
        %v1359 = vand.u32 %v1358, 4294901760
        %1360 = vmatprep.subr.mxu0 %v1359
        %v1361 = vand.u32 %v309, 4294901760
        %v1362 = vsub.f32 %v309, %v1361
        %v1363 = vand.u32 %v1362, 4294901760
        %1364 = vmatpush1.msra.mxu0 %v1363
        %v1365 = vand.u32 %v312, 4294901760
        %v1366 = vsub.f32 %v312, %v1365
        %v1367 = vand.u32 %v1366, 4294901760
        %1368 = vmatprep.subr.mxu0 %v1367
        %v1369 = vand.u32 %v311, 4294901760
        %v1370 = vsub.f32 %v311, %v1369
        %v1371 = vand.u32 %v1370, 4294901760
        %1372 = vmatpush1.msra.mxu0 %v1371
        %v1373 = vand.u32 %v314, 4294901760
        %v1374 = vsub.f32 %v314, %v1373
        %v1375 = vand.u32 %v1374, 4294901760
        %1376 = vmatprep.subr.mxu0 %v1375
        %v1377 = vand.u32 %v313, 4294901760
        %v1378 = vsub.f32 %v313, %v1377
        %v1379 = vand.u32 %v1378, 4294901760
        %1380 = vmatpush1.msra.mxu0 %v1379
        %v1381 = vand.u32 %v316, 4294901760
        %v1382 = vsub.f32 %v316, %v1381
        %v1383 = vand.u32 %v1382, 4294901760
        %1384 = vmatprep.subr.mxu0 %v1383
        %v1385 = vand.u32 %v315, 4294901760
        %v1386 = vsub.f32 %v315, %v1385
        %v1387 = vand.u32 %v1386, 4294901760
        %1388 = vmatpush1.msra.mxu0 %v1387
        %v1389 = vand.u32 %v318, 4294901760
        %v1390 = vsub.f32 %v318, %v1389
        %v1391 = vand.u32 %v1390, 4294901760
        %1392 = vmatprep.subr.mxu0 %v1391
        %v1393 = vand.u32 %v317, 4294901760
        %v1394 = vsub.f32 %v317, %v1393
        %v1395 = vand.u32 %v1394, 4294901760
        %1396 = vmatpush1.msra.mxu0 %v1395
        %v1397 = vand.u32 %v320, 4294901760
        %v1398 = vsub.f32 %v320, %v1397
        %v1399 = vand.u32 %v1398, 4294901760
        %1400 = vmatprep.subr.mxu0 %v1399
        %v1401 = vand.u32 %v319, 4294901760
        %v1402 = vsub.f32 %v319, %v1401
        %v1403 = vand.u32 %v1402, 4294901760
        %1404 = vmatpush1.msra.mxu0 %v1403
        %v1405 = vand.u32 %v322, 4294901760
        %v1406 = vsub.f32 %v322, %v1405
        %v1407 = vand.u32 %v1406, 4294901760
        %1408 = vmatprep.subr.mxu0 %v1407
        %v1409 = vand.u32 %v321, 4294901760
        %v1410 = vsub.f32 %v321, %v1409
        %v1411 = vand.u32 %v1410, 4294901760
        %1412 = vmatpush1.msra.mxu0 %v1411
        %v1413 = vand.u32 %v324, 4294901760
        %v1414 = vsub.f32 %v324, %v1413
        %v1415 = vand.u32 %v1414, 4294901760
        %1416 = vmatprep.subr.mxu0 %v1415
        %v1417 = vand.u32 %v323, 4294901760
        %v1418 = vsub.f32 %v323, %v1417
        %v1419 = vand.u32 %v1418, 4294901760
        %1420 = vmatpush1.msra.mxu0 %v1419
        %v1421 = vand.u32 %v326, 4294901760
        %v1422 = vsub.f32 %v326, %v1421
        %v1423 = vand.u32 %v1422, 4294901760
        %1424 = vmatprep.subr.mxu0 %v1423
        %v1425 = vand.u32 %v325, 4294901760
        %v1426 = vsub.f32 %v325, %v1425
        %v1427 = vand.u32 %v1426, 4294901760
        %1428 = vmatpush1.msra.mxu0 %v1427
        %v1429 = vand.u32 %v328, 4294901760
        %v1430 = vsub.f32 %v328, %v1429
        %v1431 = vand.u32 %v1430, 4294901760
        %1432 = vmatprep.subr.mxu0 %v1431
        %v1433 = vand.u32 %v327, 4294901760
        %v1434 = vsub.f32 %v327, %v1433
        %v1435 = vand.u32 %v1434, 4294901760
        %1436 = vmatpush1.msra.mxu0 %v1435
        %v1437 = vand.u32 %v330, 4294901760
        %v1438 = vsub.f32 %v330, %v1437
        %v1439 = vand.u32 %v1438, 4294901760
        %1440 = vmatprep.subr.mxu0 %v1439
        %v1441 = vand.u32 %v329, 4294901760
        %v1442 = vsub.f32 %v329, %v1441
        %v1443 = vand.u32 %v1442, 4294901760
        %1444 = vmatpush1.msra.mxu0 %v1443
        %v1445 = vand.u32 %v332, 4294901760
        %v1446 = vsub.f32 %v332, %v1445
        %v1447 = vand.u32 %v1446, 4294901760
        %1448 = vmatprep.subr.mxu0 %v1447
        %v1449 = vand.u32 %v331, 4294901760
        %v1450 = vsub.f32 %v331, %v1449
        %v1451 = vand.u32 %v1450, 4294901760
        %1452 = vmatpush1.msra.mxu0 %v1451
        %v1453 = vand.u32 %v334, 4294901760
        %v1454 = vsub.f32 %v334, %v1453
        %v1455 = vand.u32 %v1454, 4294901760
        %1456 = vmatprep.subr.mxu0 %v1455
        %v1457 = vand.u32 %v333, 4294901760
        %v1458 = vsub.f32 %v333, %v1457
        %v1459 = vand.u32 %v1458, 4294901760
        %1460 = vmatpush1.msra.mxu0 %v1459
        %v1461 = vand.u32 %v336, 4294901760
        %v1462 = vsub.f32 %v336, %v1461
        %v1463 = vand.u32 %v1462, 4294901760
        %1464 = vmatprep.subr.mxu0 %v1463
        %v1465 = vand.u32 %v335, 4294901760
        %v1466 = vsub.f32 %v335, %v1465
        %v1467 = vand.u32 %v1466, 4294901760
        %1468 = vmatpush1.msra.mxu0 %v1467
        %v1469 = vand.u32 %v338, 4294901760
        %v1470 = vsub.f32 %v338, %v1469
        %v1471 = vand.u32 %v1470, 4294901760
        %1472 = vmatprep.subr.mxu0 %v1471
        %v1473 = vand.u32 %v337, 4294901760
        %v1474 = vsub.f32 %v337, %v1473
        %v1475 = vand.u32 %v1474, 4294901760
        %1476 = vmatpush1.msra.mxu0 %v1475
        %v1477 = vand.u32 %v207, 4294901760
        %1478 = vmatprep.mubr.f32.mxu0 %v1477
        %v1479 = vand.u32 %v200, 4294901760
        %1480 = vmatmul.mubr.f32.gmra.mrb[0].mxu0 %v1479
        %v1481 = vpop.f32.mrb[0].mxu0
        %v1482 = vadd.f32 %v1217, %v1481
        %v1483 = vpop.f32.mrb[0].mxu0
        %v1484 = vadd.f32 %v1219, %v1483
        %1485 = vdwg.mxu0
        %v1486 = vand.u32 %v276, 4294901760
        %1487 = vmatprep.subr.mxu0 %v1486
        %v1488 = vand.u32 %v275, 4294901760
        %1489 = vmatpush1.msra.mxu0 %v1488
        %v1490 = vand.u32 %v278, 4294901760
        %1491 = vmatprep.subr.mxu0 %v1490
        %v1492 = vand.u32 %v277, 4294901760
        %1493 = vmatpush1.msra.mxu0 %v1492
        %v1494 = vand.u32 %v280, 4294901760
        %1495 = vmatprep.subr.mxu0 %v1494
        %v1496 = vand.u32 %v279, 4294901760
        %1497 = vmatpush1.msra.mxu0 %v1496
        %v1498 = vand.u32 %v282, 4294901760
        %1499 = vmatprep.subr.mxu0 %v1498
        %v1500 = vand.u32 %v281, 4294901760
        %1501 = vmatpush1.msra.mxu0 %v1500
        %v1502 = vand.u32 %v284, 4294901760
        %1503 = vmatprep.subr.mxu0 %v1502
        %v1504 = vand.u32 %v283, 4294901760
        %1505 = vmatpush1.msra.mxu0 %v1504
        %v1506 = vand.u32 %v286, 4294901760
        %1507 = vmatprep.subr.mxu0 %v1506
        %v1508 = vand.u32 %v285, 4294901760
        %1509 = vmatpush1.msra.mxu0 %v1508
        %v1510 = vand.u32 %v288, 4294901760
        %1511 = vmatprep.subr.mxu0 %v1510
        %v1512 = vand.u32 %v287, 4294901760
        %1513 = vmatpush1.msra.mxu0 %v1512
        %v1514 = vand.u32 %v290, 4294901760
        %1515 = vmatprep.subr.mxu0 %v1514
        %v1516 = vand.u32 %v289, 4294901760
        %1517 = vmatpush1.msra.mxu0 %v1516
        %v1518 = vand.u32 %v292, 4294901760
        %1519 = vmatprep.subr.mxu0 %v1518
        %v1520 = vand.u32 %v291, 4294901760
        %1521 = vmatpush1.msra.mxu0 %v1520
        %v1522 = vand.u32 %v294, 4294901760
        %1523 = vmatprep.subr.mxu0 %v1522
        %v1524 = vand.u32 %v293, 4294901760
        %1525 = vmatpush1.msra.mxu0 %v1524
        %v1526 = vand.u32 %v296, 4294901760
        %1527 = vmatprep.subr.mxu0 %v1526
        %v1528 = vand.u32 %v295, 4294901760
        %1529 = vmatpush1.msra.mxu0 %v1528
        %v1530 = vand.u32 %v298, 4294901760
        %1531 = vmatprep.subr.mxu0 %v1530
        %v1532 = vand.u32 %v297, 4294901760
        %1533 = vmatpush1.msra.mxu0 %v1532
        %v1534 = vand.u32 %v300, 4294901760
        %1535 = vmatprep.subr.mxu0 %v1534
        %v1536 = vand.u32 %v299, 4294901760
        %1537 = vmatpush1.msra.mxu0 %v1536
        %v1538 = vand.u32 %v302, 4294901760
        %1539 = vmatprep.subr.mxu0 %v1538
        %v1540 = vand.u32 %v301, 4294901760
        %1541 = vmatpush1.msra.mxu0 %v1540
        %v1542 = vand.u32 %v304, 4294901760
        %1543 = vmatprep.subr.mxu0 %v1542
        %v1544 = vand.u32 %v303, 4294901760
        %1545 = vmatpush1.msra.mxu0 %v1544
        %v1546 = vand.u32 %v306, 4294901760
        %1547 = vmatprep.subr.mxu0 %v1546
        %v1548 = vand.u32 %v305, 4294901760
        %1549 = vmatpush1.msra.mxu0 %v1548
        %v1550 = vand.u32 %v308, 4294901760
        %1551 = vmatprep.subr.mxu0 %v1550
        %v1552 = vand.u32 %v307, 4294901760
        %1553 = vmatpush1.msra.mxu0 %v1552
        %v1554 = vand.u32 %v310, 4294901760
        %1555 = vmatprep.subr.mxu0 %v1554
        %v1556 = vand.u32 %v309, 4294901760
        %1557 = vmatpush1.msra.mxu0 %v1556
        %v1558 = vand.u32 %v312, 4294901760
        %1559 = vmatprep.subr.mxu0 %v1558
        %v1560 = vand.u32 %v311, 4294901760
        %1561 = vmatpush1.msra.mxu0 %v1560
        %v1562 = vand.u32 %v314, 4294901760
        %1563 = vmatprep.subr.mxu0 %v1562
        %v1564 = vand.u32 %v313, 4294901760
        %1565 = vmatpush1.msra.mxu0 %v1564
        %v1566 = vand.u32 %v316, 4294901760
        %1567 = vmatprep.subr.mxu0 %v1566
        %v1568 = vand.u32 %v315, 4294901760
        %1569 = vmatpush1.msra.mxu0 %v1568
        %v1570 = vand.u32 %v318, 4294901760
        %1571 = vmatprep.subr.mxu0 %v1570
        %v1572 = vand.u32 %v317, 4294901760
        %1573 = vmatpush1.msra.mxu0 %v1572
        %v1574 = vand.u32 %v320, 4294901760
        %1575 = vmatprep.subr.mxu0 %v1574
        %v1576 = vand.u32 %v319, 4294901760
        %1577 = vmatpush1.msra.mxu0 %v1576
        %v1578 = vand.u32 %v322, 4294901760
        %1579 = vmatprep.subr.mxu0 %v1578
        %v1580 = vand.u32 %v321, 4294901760
        %1581 = vmatpush1.msra.mxu0 %v1580
        %v1582 = vand.u32 %v324, 4294901760
        %1583 = vmatprep.subr.mxu0 %v1582
        %v1584 = vand.u32 %v323, 4294901760
        %1585 = vmatpush1.msra.mxu0 %v1584
        %v1586 = vand.u32 %v326, 4294901760
        %1587 = vmatprep.subr.mxu0 %v1586
        %v1588 = vand.u32 %v325, 4294901760
        %1589 = vmatpush1.msra.mxu0 %v1588
        %v1590 = vand.u32 %v328, 4294901760
        %1591 = vmatprep.subr.mxu0 %v1590
        %v1592 = vand.u32 %v327, 4294901760
        %1593 = vmatpush1.msra.mxu0 %v1592
        %v1594 = vand.u32 %v330, 4294901760
        %1595 = vmatprep.subr.mxu0 %v1594
        %v1596 = vand.u32 %v329, 4294901760
        %1597 = vmatpush1.msra.mxu0 %v1596
        %v1598 = vand.u32 %v332, 4294901760
        %1599 = vmatprep.subr.mxu0 %v1598
        %v1600 = vand.u32 %v331, 4294901760
        %1601 = vmatpush1.msra.mxu0 %v1600
        %v1602 = vand.u32 %v334, 4294901760
        %1603 = vmatprep.subr.mxu0 %v1602
        %v1604 = vand.u32 %v333, 4294901760
        %1605 = vmatpush1.msra.mxu0 %v1604
        %v1606 = vand.u32 %v336, 4294901760
        %1607 = vmatprep.subr.mxu0 %v1606
        %v1608 = vand.u32 %v335, 4294901760
        %1609 = vmatpush1.msra.mxu0 %v1608
        %v1610 = vand.u32 %v338, 4294901760
        %1611 = vmatprep.subr.mxu0 %v1610
        %v1612 = vand.u32 %v337, 4294901760
        %1613 = vmatpush1.msra.mxu0 %v1612
        %v1614 = vand.u32 %v207, 4294901760
        %1615 = vmatprep.mubr.f32.mxu0 %v1614
        %v1616 = vand.u32 %v200, 4294901760
        %1617 = vmatmul.mubr.f32.gmra.mrb[0].mxu0 %v1616
        %v1618 = vpop.f32.mrb[0].mxu0
        %v1619 = vadd.f32 %v1482, %v1618
        %v1620 = vpop.f32.mrb[0].mxu0
        %v1621 = vadd.f32 %v1484, %v1620
        %1622 = vdwg.mxu0
        %v1623 = vand.u32 %v211, 4294901760
        %1624 = vmatprep.subr.mxu0 %v1623
        %v1625 = vand.u32 %v210, 4294901760
        %1626 = vmatpush1.msra.mxu0 %v1625
        %v1627 = vand.u32 %v213, 4294901760
        %1628 = vmatprep.subr.mxu0 %v1627
        %v1629 = vand.u32 %v212, 4294901760
        %1630 = vmatpush1.msra.mxu0 %v1629
        %v1631 = vand.u32 %v215, 4294901760
        %1632 = vmatprep.subr.mxu0 %v1631
        %v1633 = vand.u32 %v214, 4294901760
        %1634 = vmatpush1.msra.mxu0 %v1633
        %v1635 = vand.u32 %v217, 4294901760
        %1636 = vmatprep.subr.mxu0 %v1635
        %v1637 = vand.u32 %v216, 4294901760
        %1638 = vmatpush1.msra.mxu0 %v1637
        %v1639 = vand.u32 %v219, 4294901760
        %1640 = vmatprep.subr.mxu0 %v1639
        %v1641 = vand.u32 %v218, 4294901760
        %1642 = vmatpush1.msra.mxu0 %v1641
        %v1643 = vand.u32 %v221, 4294901760
        %1644 = vmatprep.subr.mxu0 %v1643
        %v1645 = vand.u32 %v220, 4294901760
        %1646 = vmatpush1.msra.mxu0 %v1645
        %v1647 = vand.u32 %v223, 4294901760
        %1648 = vmatprep.subr.mxu0 %v1647
        %v1649 = vand.u32 %v222, 4294901760
        %1650 = vmatpush1.msra.mxu0 %v1649
        %v1651 = vand.u32 %v225, 4294901760
        %1652 = vmatprep.subr.mxu0 %v1651
        %v1653 = vand.u32 %v224, 4294901760
        %1654 = vmatpush1.msra.mxu0 %v1653
        %v1655 = vand.u32 %v227, 4294901760
        %1656 = vmatprep.subr.mxu0 %v1655
        %v1657 = vand.u32 %v226, 4294901760
        %1658 = vmatpush1.msra.mxu0 %v1657
        %v1659 = vand.u32 %v229, 4294901760
        %1660 = vmatprep.subr.mxu0 %v1659
        %v1661 = vand.u32 %v228, 4294901760
        %1662 = vmatpush1.msra.mxu0 %v1661
        %v1663 = vand.u32 %v231, 4294901760
        %1664 = vmatprep.subr.mxu0 %v1663
        %v1665 = vand.u32 %v230, 4294901760
        %1666 = vmatpush1.msra.mxu0 %v1665
        %v1667 = vand.u32 %v233, 4294901760
        %1668 = vmatprep.subr.mxu0 %v1667
        %v1669 = vand.u32 %v232, 4294901760
        %1670 = vmatpush1.msra.mxu0 %v1669
        %v1671 = vand.u32 %v235, 4294901760
        %1672 = vmatprep.subr.mxu0 %v1671
        %v1673 = vand.u32 %v234, 4294901760
        %1674 = vmatpush1.msra.mxu0 %v1673
        %v1675 = vand.u32 %v237, 4294901760
        %1676 = vmatprep.subr.mxu0 %v1675
        %v1677 = vand.u32 %v236, 4294901760
        %1678 = vmatpush1.msra.mxu0 %v1677
        %v1679 = vand.u32 %v239, 4294901760
        %1680 = vmatprep.subr.mxu0 %v1679
        %v1681 = vand.u32 %v238, 4294901760
        %1682 = vmatpush1.msra.mxu0 %v1681
        %v1683 = vand.u32 %v241, 4294901760
        %1684 = vmatprep.subr.mxu0 %v1683
        %v1685 = vand.u32 %v240, 4294901760
        %1686 = vmatpush1.msra.mxu0 %v1685
        %v1687 = vand.u32 %v243, 4294901760
        %1688 = vmatprep.subr.mxu0 %v1687
        %v1689 = vand.u32 %v242, 4294901760
        %1690 = vmatpush1.msra.mxu0 %v1689
        %v1691 = vand.u32 %v245, 4294901760
        %1692 = vmatprep.subr.mxu0 %v1691
        %v1693 = vand.u32 %v244, 4294901760
        %1694 = vmatpush1.msra.mxu0 %v1693
        %v1695 = vand.u32 %v247, 4294901760
        %1696 = vmatprep.subr.mxu0 %v1695
        %v1697 = vand.u32 %v246, 4294901760
        %1698 = vmatpush1.msra.mxu0 %v1697
        %v1699 = vand.u32 %v249, 4294901760
        %1700 = vmatprep.subr.mxu0 %v1699
        %v1701 = vand.u32 %v248, 4294901760
        %1702 = vmatpush1.msra.mxu0 %v1701
        %v1703 = vand.u32 %v251, 4294901760
        %1704 = vmatprep.subr.mxu0 %v1703
        %v1705 = vand.u32 %v250, 4294901760
        %1706 = vmatpush1.msra.mxu0 %v1705
        %v1707 = vand.u32 %v253, 4294901760
        %1708 = vmatprep.subr.mxu0 %v1707
        %v1709 = vand.u32 %v252, 4294901760
        %1710 = vmatpush1.msra.mxu0 %v1709
        %v1711 = vand.u32 %v255, 4294901760
        %1712 = vmatprep.subr.mxu0 %v1711
        %v1713 = vand.u32 %v254, 4294901760
        %1714 = vmatpush1.msra.mxu0 %v1713
        %v1715 = vand.u32 %v257, 4294901760
        %1716 = vmatprep.subr.mxu0 %v1715
        %v1717 = vand.u32 %v256, 4294901760
        %1718 = vmatpush1.msra.mxu0 %v1717
        %v1719 = vand.u32 %v259, 4294901760
        %1720 = vmatprep.subr.mxu0 %v1719
        %v1721 = vand.u32 %v258, 4294901760
        %1722 = vmatpush1.msra.mxu0 %v1721
        %v1723 = vand.u32 %v261, 4294901760
        %1724 = vmatprep.subr.mxu0 %v1723
        %v1725 = vand.u32 %v260, 4294901760
        %1726 = vmatpush1.msra.mxu0 %v1725
        %v1727 = vand.u32 %v263, 4294901760
        %1728 = vmatprep.subr.mxu0 %v1727
        %v1729 = vand.u32 %v262, 4294901760
        %1730 = vmatpush1.msra.mxu0 %v1729
        %v1731 = vand.u32 %v265, 4294901760
        %1732 = vmatprep.subr.mxu0 %v1731
        %v1733 = vand.u32 %v264, 4294901760
        %1734 = vmatpush1.msra.mxu0 %v1733
        %v1735 = vand.u32 %v267, 4294901760
        %1736 = vmatprep.subr.mxu0 %v1735
        %v1737 = vand.u32 %v266, 4294901760
        %1738 = vmatpush1.msra.mxu0 %v1737
        %v1739 = vand.u32 %v269, 4294901760
        %1740 = vmatprep.subr.mxu0 %v1739
        %v1741 = vand.u32 %v268, 4294901760
        %1742 = vmatpush1.msra.mxu0 %v1741
        %v1743 = vand.u32 %v271, 4294901760
        %1744 = vmatprep.subr.mxu0 %v1743
        %v1745 = vand.u32 %v270, 4294901760
        %1746 = vmatpush1.msra.mxu0 %v1745
        %v1747 = vand.u32 %v273, 4294901760
        %1748 = vmatprep.subr.mxu0 %v1747
        %v1749 = vand.u32 %v272, 4294901760
        %1750 = vmatpush1.msra.mxu0 %v1749
        %v1751 = vand.u32 %v209, 4294901760
        %v1752 = vsub.f32 %v209, %v1751
        %v1753 = vand.u32 %v1752, 4294901760
        %v1754 = vsub.f32 %v1752, %v1753
        %v1755 = vand.u32 %v1754, 4294901760
        %1756 = vmatprep.mubr.f32.mxu0 %v1755
        %v1757 = vand.u32 %v208, 4294901760
        %v1758 = vsub.f32 %v208, %v1757
        %v1759 = vand.u32 %v1758, 4294901760
        %v1760 = vsub.f32 %v1758, %v1759
        %v1761 = vand.u32 %v1760, 4294901760
        %1762 = vmatmul.mubr.f32.gmra.mrb[0].mxu0 %v1761
        %v1763 = vpop.f32.mrb[0].mxu0
        %v1764 = vadd.f32 %v1619, %v1763
        %v1765 = vpop.f32.mrb[0].mxu0
        %v1766 = vadd.f32 %v1621, %v1765
        %1767 = vdwg.mxu0
        %v1768 = vand.u32 %v211, 4294901760
        %v1769 = vsub.f32 %v211, %v1768
        %v1770 = vand.u32 %v1769, 4294901760
        %v1771 = vsub.f32 %v1769, %v1770
        %v1772 = vand.u32 %v1771, 4294901760
        %1773 = vmatprep.subr.mxu0 %v1772
        %v1774 = vand.u32 %v210, 4294901760
        %v1775 = vsub.f32 %v210, %v1774
        %v1776 = vand.u32 %v1775, 4294901760
        %v1777 = vsub.f32 %v1775, %v1776
        %v1778 = vand.u32 %v1777, 4294901760
        %1779 = vmatpush1.msra.mxu0 %v1778
        %v1780 = vand.u32 %v213, 4294901760
        %v1781 = vsub.f32 %v213, %v1780
        %v1782 = vand.u32 %v1781, 4294901760
        %v1783 = vsub.f32 %v1781, %v1782
        %v1784 = vand.u32 %v1783, 4294901760
        %1785 = vmatprep.subr.mxu0 %v1784
        %v1786 = vand.u32 %v212, 4294901760
        %v1787 = vsub.f32 %v212, %v1786
        %v1788 = vand.u32 %v1787, 4294901760
        %v1789 = vsub.f32 %v1787, %v1788
        %v1790 = vand.u32 %v1789, 4294901760
        %1791 = vmatpush1.msra.mxu0 %v1790
        %v1792 = vand.u32 %v215, 4294901760
        %v1793 = vsub.f32 %v215, %v1792
        %v1794 = vand.u32 %v1793, 4294901760
        %v1795 = vsub.f32 %v1793, %v1794
        %v1796 = vand.u32 %v1795, 4294901760
        %1797 = vmatprep.subr.mxu0 %v1796
        %v1798 = vand.u32 %v214, 4294901760
        %v1799 = vsub.f32 %v214, %v1798
        %v1800 = vand.u32 %v1799, 4294901760
        %v1801 = vsub.f32 %v1799, %v1800
        %v1802 = vand.u32 %v1801, 4294901760
        %1803 = vmatpush1.msra.mxu0 %v1802
        %v1804 = vand.u32 %v217, 4294901760
        %v1805 = vsub.f32 %v217, %v1804
        %v1806 = vand.u32 %v1805, 4294901760
        %v1807 = vsub.f32 %v1805, %v1806
        %v1808 = vand.u32 %v1807, 4294901760
        %1809 = vmatprep.subr.mxu0 %v1808
        %v1810 = vand.u32 %v216, 4294901760
        %v1811 = vsub.f32 %v216, %v1810
        %v1812 = vand.u32 %v1811, 4294901760
        %v1813 = vsub.f32 %v1811, %v1812
        %v1814 = vand.u32 %v1813, 4294901760
        %1815 = vmatpush1.msra.mxu0 %v1814
        %v1816 = vand.u32 %v219, 4294901760
        %v1817 = vsub.f32 %v219, %v1816
        %v1818 = vand.u32 %v1817, 4294901760
        %v1819 = vsub.f32 %v1817, %v1818
        %v1820 = vand.u32 %v1819, 4294901760
        %1821 = vmatprep.subr.mxu0 %v1820
        %v1822 = vand.u32 %v218, 4294901760
        %v1823 = vsub.f32 %v218, %v1822
        %v1824 = vand.u32 %v1823, 4294901760
        %v1825 = vsub.f32 %v1823, %v1824
        %v1826 = vand.u32 %v1825, 4294901760
        %1827 = vmatpush1.msra.mxu0 %v1826
        %v1828 = vand.u32 %v221, 4294901760
        %v1829 = vsub.f32 %v221, %v1828
        %v1830 = vand.u32 %v1829, 4294901760
        %v1831 = vsub.f32 %v1829, %v1830
        %v1832 = vand.u32 %v1831, 4294901760
        %1833 = vmatprep.subr.mxu0 %v1832
        %v1834 = vand.u32 %v220, 4294901760
        %v1835 = vsub.f32 %v220, %v1834
        %v1836 = vand.u32 %v1835, 4294901760
        %v1837 = vsub.f32 %v1835, %v1836
        %v1838 = vand.u32 %v1837, 4294901760
        %1839 = vmatpush1.msra.mxu0 %v1838
        %v1840 = vand.u32 %v223, 4294901760
        %v1841 = vsub.f32 %v223, %v1840
        %v1842 = vand.u32 %v1841, 4294901760
        %v1843 = vsub.f32 %v1841, %v1842
        %v1844 = vand.u32 %v1843, 4294901760
        %1845 = vmatprep.subr.mxu0 %v1844
        %v1846 = vand.u32 %v222, 4294901760
        %v1847 = vsub.f32 %v222, %v1846
        %v1848 = vand.u32 %v1847, 4294901760
        %v1849 = vsub.f32 %v1847, %v1848
        %v1850 = vand.u32 %v1849, 4294901760
        %1851 = vmatpush1.msra.mxu0 %v1850
        %v1852 = vand.u32 %v225, 4294901760
        %v1853 = vsub.f32 %v225, %v1852
        %v1854 = vand.u32 %v1853, 4294901760
        %v1855 = vsub.f32 %v1853, %v1854
        %v1856 = vand.u32 %v1855, 4294901760
        %1857 = vmatprep.subr.mxu0 %v1856
        %v1858 = vand.u32 %v224, 4294901760
        %v1859 = vsub.f32 %v224, %v1858
        %v1860 = vand.u32 %v1859, 4294901760
        %v1861 = vsub.f32 %v1859, %v1860
        %v1862 = vand.u32 %v1861, 4294901760
        %1863 = vmatpush1.msra.mxu0 %v1862
        %v1864 = vand.u32 %v227, 4294901760
        %v1865 = vsub.f32 %v227, %v1864
        %v1866 = vand.u32 %v1865, 4294901760
        %v1867 = vsub.f32 %v1865, %v1866
        %v1868 = vand.u32 %v1867, 4294901760
        %1869 = vmatprep.subr.mxu0 %v1868
        %v1870 = vand.u32 %v226, 4294901760
        %v1871 = vsub.f32 %v226, %v1870
        %v1872 = vand.u32 %v1871, 4294901760
        %v1873 = vsub.f32 %v1871, %v1872
        %v1874 = vand.u32 %v1873, 4294901760
        %1875 = vmatpush1.msra.mxu0 %v1874
        %v1876 = vand.u32 %v229, 4294901760
        %v1877 = vsub.f32 %v229, %v1876
        %v1878 = vand.u32 %v1877, 4294901760
        %v1879 = vsub.f32 %v1877, %v1878
        %v1880 = vand.u32 %v1879, 4294901760
        %1881 = vmatprep.subr.mxu0 %v1880
        %v1882 = vand.u32 %v228, 4294901760
        %v1883 = vsub.f32 %v228, %v1882
        %v1884 = vand.u32 %v1883, 4294901760
        %v1885 = vsub.f32 %v1883, %v1884
        %v1886 = vand.u32 %v1885, 4294901760
        %1887 = vmatpush1.msra.mxu0 %v1886
        %v1888 = vand.u32 %v231, 4294901760
        %v1889 = vsub.f32 %v231, %v1888
        %v1890 = vand.u32 %v1889, 4294901760
        %v1891 = vsub.f32 %v1889, %v1890
        %v1892 = vand.u32 %v1891, 4294901760
        %1893 = vmatprep.subr.mxu0 %v1892
        %v1894 = vand.u32 %v230, 4294901760
        %v1895 = vsub.f32 %v230, %v1894
        %v1896 = vand.u32 %v1895, 4294901760
        %v1897 = vsub.f32 %v1895, %v1896
        %v1898 = vand.u32 %v1897, 4294901760
        %1899 = vmatpush1.msra.mxu0 %v1898
        %v1900 = vand.u32 %v233, 4294901760
        %v1901 = vsub.f32 %v233, %v1900
        %v1902 = vand.u32 %v1901, 4294901760
        %v1903 = vsub.f32 %v1901, %v1902
        %v1904 = vand.u32 %v1903, 4294901760
        %1905 = vmatprep.subr.mxu0 %v1904
        %v1906 = vand.u32 %v232, 4294901760
        %v1907 = vsub.f32 %v232, %v1906
        %v1908 = vand.u32 %v1907, 4294901760
        %v1909 = vsub.f32 %v1907, %v1908
        %v1910 = vand.u32 %v1909, 4294901760
        %1911 = vmatpush1.msra.mxu0 %v1910
        %v1912 = vand.u32 %v235, 4294901760
        %v1913 = vsub.f32 %v235, %v1912
        %v1914 = vand.u32 %v1913, 4294901760
        %v1915 = vsub.f32 %v1913, %v1914
        %v1916 = vand.u32 %v1915, 4294901760
        %1917 = vmatprep.subr.mxu0 %v1916
        %v1918 = vand.u32 %v234, 4294901760
        %v1919 = vsub.f32 %v234, %v1918
        %v1920 = vand.u32 %v1919, 4294901760
        %v1921 = vsub.f32 %v1919, %v1920
        %v1922 = vand.u32 %v1921, 4294901760
        %1923 = vmatpush1.msra.mxu0 %v1922
        %v1924 = vand.u32 %v237, 4294901760
        %v1925 = vsub.f32 %v237, %v1924
        %v1926 = vand.u32 %v1925, 4294901760
        %v1927 = vsub.f32 %v1925, %v1926
        %v1928 = vand.u32 %v1927, 4294901760
        %1929 = vmatprep.subr.mxu0 %v1928
        %v1930 = vand.u32 %v236, 4294901760
        %v1931 = vsub.f32 %v236, %v1930
        %v1932 = vand.u32 %v1931, 4294901760
        %v1933 = vsub.f32 %v1931, %v1932
        %v1934 = vand.u32 %v1933, 4294901760
        %1935 = vmatpush1.msra.mxu0 %v1934
        %v1936 = vand.u32 %v239, 4294901760
        %v1937 = vsub.f32 %v239, %v1936
        %v1938 = vand.u32 %v1937, 4294901760
        %v1939 = vsub.f32 %v1937, %v1938
        %v1940 = vand.u32 %v1939, 4294901760
        %1941 = vmatprep.subr.mxu0 %v1940
        %v1942 = vand.u32 %v238, 4294901760
        %v1943 = vsub.f32 %v238, %v1942
        %v1944 = vand.u32 %v1943, 4294901760
        %v1945 = vsub.f32 %v1943, %v1944
        %v1946 = vand.u32 %v1945, 4294901760
        %1947 = vmatpush1.msra.mxu0 %v1946
        %v1948 = vand.u32 %v241, 4294901760
        %v1949 = vsub.f32 %v241, %v1948
        %v1950 = vand.u32 %v1949, 4294901760
        %v1951 = vsub.f32 %v1949, %v1950
        %v1952 = vand.u32 %v1951, 4294901760
        %1953 = vmatprep.subr.mxu0 %v1952
        %v1954 = vand.u32 %v240, 4294901760
        %v1955 = vsub.f32 %v240, %v1954
        %v1956 = vand.u32 %v1955, 4294901760
        %v1957 = vsub.f32 %v1955, %v1956
        %v1958 = vand.u32 %v1957, 4294901760
        %1959 = vmatpush1.msra.mxu0 %v1958
        %v1960 = vand.u32 %v243, 4294901760
        %v1961 = vsub.f32 %v243, %v1960
        %v1962 = vand.u32 %v1961, 4294901760
        %v1963 = vsub.f32 %v1961, %v1962
        %v1964 = vand.u32 %v1963, 4294901760
        %1965 = vmatprep.subr.mxu0 %v1964
        %v1966 = vand.u32 %v242, 4294901760
        %v1967 = vsub.f32 %v242, %v1966
        %v1968 = vand.u32 %v1967, 4294901760
        %v1969 = vsub.f32 %v1967, %v1968
        %v1970 = vand.u32 %v1969, 4294901760
        %1971 = vmatpush1.msra.mxu0 %v1970
        %v1972 = vand.u32 %v245, 4294901760
        %v1973 = vsub.f32 %v245, %v1972
        %v1974 = vand.u32 %v1973, 4294901760
        %v1975 = vsub.f32 %v1973, %v1974
        %v1976 = vand.u32 %v1975, 4294901760
        %1977 = vmatprep.subr.mxu0 %v1976
        %v1978 = vand.u32 %v244, 4294901760
        %v1979 = vsub.f32 %v244, %v1978
        %v1980 = vand.u32 %v1979, 4294901760
        %v1981 = vsub.f32 %v1979, %v1980
        %v1982 = vand.u32 %v1981, 4294901760
        %1983 = vmatpush1.msra.mxu0 %v1982
        %v1984 = vand.u32 %v247, 4294901760
        %v1985 = vsub.f32 %v247, %v1984
        %v1986 = vand.u32 %v1985, 4294901760
        %v1987 = vsub.f32 %v1985, %v1986
        %v1988 = vand.u32 %v1987, 4294901760
        %1989 = vmatprep.subr.mxu0 %v1988
        %v1990 = vand.u32 %v246, 4294901760
        %v1991 = vsub.f32 %v246, %v1990
        %v1992 = vand.u32 %v1991, 4294901760
        %v1993 = vsub.f32 %v1991, %v1992
        %v1994 = vand.u32 %v1993, 4294901760
        %1995 = vmatpush1.msra.mxu0 %v1994
        %v1996 = vand.u32 %v249, 4294901760
        %v1997 = vsub.f32 %v249, %v1996
        %v1998 = vand.u32 %v1997, 4294901760
        %v1999 = vsub.f32 %v1997, %v1998
        %v2000 = vand.u32 %v1999, 4294901760
        %2001 = vmatprep.subr.mxu0 %v2000
        %v2002 = vand.u32 %v248, 4294901760
        %v2003 = vsub.f32 %v248, %v2002
        %v2004 = vand.u32 %v2003, 4294901760
        %v2005 = vsub.f32 %v2003, %v2004
        %v2006 = vand.u32 %v2005, 4294901760
        %2007 = vmatpush1.msra.mxu0 %v2006
        %v2008 = vand.u32 %v251, 4294901760
        %v2009 = vsub.f32 %v251, %v2008
        %v2010 = vand.u32 %v2009, 4294901760
        %v2011 = vsub.f32 %v2009, %v2010
        %v2012 = vand.u32 %v2011, 4294901760
        %2013 = vmatprep.subr.mxu0 %v2012
        %v2014 = vand.u32 %v250, 4294901760
        %v2015 = vsub.f32 %v250, %v2014
        %v2016 = vand.u32 %v2015, 4294901760
        %v2017 = vsub.f32 %v2015, %v2016
        %v2018 = vand.u32 %v2017, 4294901760
        %2019 = vmatpush1.msra.mxu0 %v2018
        %v2020 = vand.u32 %v253, 4294901760
        %v2021 = vsub.f32 %v253, %v2020
        %v2022 = vand.u32 %v2021, 4294901760
        %v2023 = vsub.f32 %v2021, %v2022
        %v2024 = vand.u32 %v2023, 4294901760
        %2025 = vmatprep.subr.mxu0 %v2024
        %v2026 = vand.u32 %v252, 4294901760
        %v2027 = vsub.f32 %v252, %v2026
        %v2028 = vand.u32 %v2027, 4294901760
        %v2029 = vsub.f32 %v2027, %v2028
        %v2030 = vand.u32 %v2029, 4294901760
        %2031 = vmatpush1.msra.mxu0 %v2030
        %v2032 = vand.u32 %v255, 4294901760
        %v2033 = vsub.f32 %v255, %v2032
        %v2034 = vand.u32 %v2033, 4294901760
        %v2035 = vsub.f32 %v2033, %v2034
        %v2036 = vand.u32 %v2035, 4294901760
        %2037 = vmatprep.subr.mxu0 %v2036
        %v2038 = vand.u32 %v254, 4294901760
        %v2039 = vsub.f32 %v254, %v2038
        %v2040 = vand.u32 %v2039, 4294901760
        %v2041 = vsub.f32 %v2039, %v2040
        %v2042 = vand.u32 %v2041, 4294901760
        %2043 = vmatpush1.msra.mxu0 %v2042
        %v2044 = vand.u32 %v257, 4294901760
        %v2045 = vsub.f32 %v257, %v2044
        %v2046 = vand.u32 %v2045, 4294901760
        %v2047 = vsub.f32 %v2045, %v2046
        %v2048 = vand.u32 %v2047, 4294901760
        %2049 = vmatprep.subr.mxu0 %v2048
        %v2050 = vand.u32 %v256, 4294901760
        %v2051 = vsub.f32 %v256, %v2050
        %v2052 = vand.u32 %v2051, 4294901760
        %v2053 = vsub.f32 %v2051, %v2052
        %v2054 = vand.u32 %v2053, 4294901760
        %2055 = vmatpush1.msra.mxu0 %v2054
        %v2056 = vand.u32 %v259, 4294901760
        %v2057 = vsub.f32 %v259, %v2056
        %v2058 = vand.u32 %v2057, 4294901760
        %v2059 = vsub.f32 %v2057, %v2058
        %v2060 = vand.u32 %v2059, 4294901760
        %2061 = vmatprep.subr.mxu0 %v2060
        %v2062 = vand.u32 %v258, 4294901760
        %v2063 = vsub.f32 %v258, %v2062
        %v2064 = vand.u32 %v2063, 4294901760
        %v2065 = vsub.f32 %v2063, %v2064
        %v2066 = vand.u32 %v2065, 4294901760
        %2067 = vmatpush1.msra.mxu0 %v2066
        %v2068 = vand.u32 %v261, 4294901760
        %v2069 = vsub.f32 %v261, %v2068
        %v2070 = vand.u32 %v2069, 4294901760
        %v2071 = vsub.f32 %v2069, %v2070
        %v2072 = vand.u32 %v2071, 4294901760
        %2073 = vmatprep.subr.mxu0 %v2072
        %v2074 = vand.u32 %v260, 4294901760
        %v2075 = vsub.f32 %v260, %v2074
        %v2076 = vand.u32 %v2075, 4294901760
        %v2077 = vsub.f32 %v2075, %v2076
        %v2078 = vand.u32 %v2077, 4294901760
        %2079 = vmatpush1.msra.mxu0 %v2078
        %v2080 = vand.u32 %v263, 4294901760
        %v2081 = vsub.f32 %v263, %v2080
        %v2082 = vand.u32 %v2081, 4294901760
        %v2083 = vsub.f32 %v2081, %v2082
        %v2084 = vand.u32 %v2083, 4294901760
        %2085 = vmatprep.subr.mxu0 %v2084
        %v2086 = vand.u32 %v262, 4294901760
        %v2087 = vsub.f32 %v262, %v2086
        %v2088 = vand.u32 %v2087, 4294901760
        %v2089 = vsub.f32 %v2087, %v2088
        %v2090 = vand.u32 %v2089, 4294901760
        %2091 = vmatpush1.msra.mxu0 %v2090
        %v2092 = vand.u32 %v265, 4294901760
        %v2093 = vsub.f32 %v265, %v2092
        %v2094 = vand.u32 %v2093, 4294901760
        %v2095 = vsub.f32 %v2093, %v2094
        %v2096 = vand.u32 %v2095, 4294901760
        %2097 = vmatprep.subr.mxu0 %v2096
        %v2098 = vand.u32 %v264, 4294901760
        %v2099 = vsub.f32 %v264, %v2098
        %v2100 = vand.u32 %v2099, 4294901760
        %v2101 = vsub.f32 %v2099, %v2100
        %v2102 = vand.u32 %v2101, 4294901760
        %2103 = vmatpush1.msra.mxu0 %v2102
        %v2104 = vand.u32 %v267, 4294901760
        %v2105 = vsub.f32 %v267, %v2104
        %v2106 = vand.u32 %v2105, 4294901760
        %v2107 = vsub.f32 %v2105, %v2106
        %v2108 = vand.u32 %v2107, 4294901760
        %2109 = vmatprep.subr.mxu0 %v2108
        %v2110 = vand.u32 %v266, 4294901760
        %v2111 = vsub.f32 %v266, %v2110
        %v2112 = vand.u32 %v2111, 4294901760
        %v2113 = vsub.f32 %v2111, %v2112
        %v2114 = vand.u32 %v2113, 4294901760
        %2115 = vmatpush1.msra.mxu0 %v2114
        %v2116 = vand.u32 %v269, 4294901760
        %v2117 = vsub.f32 %v269, %v2116
        %v2118 = vand.u32 %v2117, 4294901760
        %v2119 = vsub.f32 %v2117, %v2118
        %v2120 = vand.u32 %v2119, 4294901760
        %2121 = vmatprep.subr.mxu0 %v2120
        %v2122 = vand.u32 %v268, 4294901760
        %v2123 = vsub.f32 %v268, %v2122
        %v2124 = vand.u32 %v2123, 4294901760
        %v2125 = vsub.f32 %v2123, %v2124
        %v2126 = vand.u32 %v2125, 4294901760
        %2127 = vmatpush1.msra.mxu0 %v2126
        %v2128 = vand.u32 %v271, 4294901760
        %v2129 = vsub.f32 %v271, %v2128
        %v2130 = vand.u32 %v2129, 4294901760
        %v2131 = vsub.f32 %v2129, %v2130
        %v2132 = vand.u32 %v2131, 4294901760
        %2133 = vmatprep.subr.mxu0 %v2132
        %v2134 = vand.u32 %v270, 4294901760
        %v2135 = vsub.f32 %v270, %v2134
        %v2136 = vand.u32 %v2135, 4294901760
        %v2137 = vsub.f32 %v2135, %v2136
        %v2138 = vand.u32 %v2137, 4294901760
        %2139 = vmatpush1.msra.mxu0 %v2138
        %v2140 = vand.u32 %v273, 4294901760
        %v2141 = vsub.f32 %v273, %v2140
        %v2142 = vand.u32 %v2141, 4294901760
        %v2143 = vsub.f32 %v2141, %v2142
        %v2144 = vand.u32 %v2143, 4294901760
        %2145 = vmatprep.subr.mxu0 %v2144
        %v2146 = vand.u32 %v272, 4294901760
        %v2147 = vsub.f32 %v272, %v2146
        %v2148 = vand.u32 %v2147, 4294901760
        %v2149 = vsub.f32 %v2147, %v2148
        %v2150 = vand.u32 %v2149, 4294901760
        %2151 = vmatpush1.msra.mxu0 %v2150
        %v2152 = vand.u32 %v209, 4294901760
        %2153 = vmatprep.mubr.f32.mxu0 %v2152
        %v2154 = vand.u32 %v208, 4294901760
        %2155 = vmatmul.mubr.f32.gmra.mrb[0].mxu0 %v2154
        %v2156 = vpop.f32.mrb[0].mxu0
        %v2157 = vadd.f32 %v1764, %v2156
        %v2158 = vpop.f32.mrb[0].mxu0
        %v2159 = vadd.f32 %v1766, %v2158
        %2160 = vdwg.mxu0
        %v2161 = vand.u32 %v211, 4294901760
        %v2162 = vsub.f32 %v211, %v2161
        %2163 = vmatprep.subr.mxu0 %v2162
        %v2164 = vand.u32 %v210, 4294901760
        %v2165 = vsub.f32 %v210, %v2164
        %2166 = vmatpush1.msra.mxu0 %v2165
        %v2167 = vand.u32 %v213, 4294901760
        %v2168 = vsub.f32 %v213, %v2167
        %2169 = vmatprep.subr.mxu0 %v2168
        %v2170 = vand.u32 %v212, 4294901760
        %v2171 = vsub.f32 %v212, %v2170
        %2172 = vmatpush1.msra.mxu0 %v2171
        %v2173 = vand.u32 %v215, 4294901760
        %v2174 = vsub.f32 %v215, %v2173
        %2175 = vmatprep.subr.mxu0 %v2174
        %v2176 = vand.u32 %v214, 4294901760
        %v2177 = vsub.f32 %v214, %v2176
        %2178 = vmatpush1.msra.mxu0 %v2177
        %v2179 = vand.u32 %v217, 4294901760
        %v2180 = vsub.f32 %v217, %v2179
        %2181 = vmatprep.subr.mxu0 %v2180
        %v2182 = vand.u32 %v216, 4294901760
        %v2183 = vsub.f32 %v216, %v2182
        %2184 = vmatpush1.msra.mxu0 %v2183
        %v2185 = vand.u32 %v219, 4294901760
        %v2186 = vsub.f32 %v219, %v2185
        %2187 = vmatprep.subr.mxu0 %v2186
        %v2188 = vand.u32 %v218, 4294901760
        %v2189 = vsub.f32 %v218, %v2188
        %2190 = vmatpush1.msra.mxu0 %v2189
        %v2191 = vand.u32 %v221, 4294901760
        %v2192 = vsub.f32 %v221, %v2191
        %2193 = vmatprep.subr.mxu0 %v2192
        %v2194 = vand.u32 %v220, 4294901760
        %v2195 = vsub.f32 %v220, %v2194
        %2196 = vmatpush1.msra.mxu0 %v2195
        %v2197 = vand.u32 %v223, 4294901760
        %v2198 = vsub.f32 %v223, %v2197
        %2199 = vmatprep.subr.mxu0 %v2198
        %v2200 = vand.u32 %v222, 4294901760
        %v2201 = vsub.f32 %v222, %v2200
        %2202 = vmatpush1.msra.mxu0 %v2201
        %v2203 = vand.u32 %v225, 4294901760
        %v2204 = vsub.f32 %v225, %v2203
        %2205 = vmatprep.subr.mxu0 %v2204
        %v2206 = vand.u32 %v224, 4294901760
        %v2207 = vsub.f32 %v224, %v2206
        %2208 = vmatpush1.msra.mxu0 %v2207
        %v2209 = vand.u32 %v227, 4294901760
        %v2210 = vsub.f32 %v227, %v2209
        %2211 = vmatprep.subr.mxu0 %v2210
        %v2212 = vand.u32 %v226, 4294901760
        %v2213 = vsub.f32 %v226, %v2212
        %2214 = vmatpush1.msra.mxu0 %v2213
        %v2215 = vand.u32 %v229, 4294901760
        %v2216 = vsub.f32 %v229, %v2215
        %2217 = vmatprep.subr.mxu0 %v2216
        %v2218 = vand.u32 %v228, 4294901760
        %v2219 = vsub.f32 %v228, %v2218
        %2220 = vmatpush1.msra.mxu0 %v2219
        %v2221 = vand.u32 %v231, 4294901760
        %v2222 = vsub.f32 %v231, %v2221
        %2223 = vmatprep.subr.mxu0 %v2222
        %v2224 = vand.u32 %v230, 4294901760
        %v2225 = vsub.f32 %v230, %v2224
        %2226 = vmatpush1.msra.mxu0 %v2225
        %v2227 = vand.u32 %v233, 4294901760
        %v2228 = vsub.f32 %v233, %v2227
        %2229 = vmatprep.subr.mxu0 %v2228
        %v2230 = vand.u32 %v232, 4294901760
        %v2231 = vsub.f32 %v232, %v2230
        %2232 = vmatpush1.msra.mxu0 %v2231
        %v2233 = vand.u32 %v235, 4294901760
        %v2234 = vsub.f32 %v235, %v2233
        %2235 = vmatprep.subr.mxu0 %v2234
        %v2236 = vand.u32 %v234, 4294901760
        %v2237 = vsub.f32 %v234, %v2236
        %2238 = vmatpush1.msra.mxu0 %v2237
        %v2239 = vand.u32 %v237, 4294901760
        %v2240 = vsub.f32 %v237, %v2239
        %2241 = vmatprep.subr.mxu0 %v2240
        %v2242 = vand.u32 %v236, 4294901760
        %v2243 = vsub.f32 %v236, %v2242
        %2244 = vmatpush1.msra.mxu0 %v2243
        %v2245 = vand.u32 %v239, 4294901760
        %v2246 = vsub.f32 %v239, %v2245
        %2247 = vmatprep.subr.mxu0 %v2246
        %v2248 = vand.u32 %v238, 4294901760
        %v2249 = vsub.f32 %v238, %v2248
        %2250 = vmatpush1.msra.mxu0 %v2249
        %v2251 = vand.u32 %v241, 4294901760
        %v2252 = vsub.f32 %v241, %v2251
        %2253 = vmatprep.subr.mxu0 %v2252
        %v2254 = vand.u32 %v240, 4294901760
        %v2255 = vsub.f32 %v240, %v2254
        %2256 = vmatpush1.msra.mxu0 %v2255
        %v2257 = vand.u32 %v243, 4294901760
        %v2258 = vsub.f32 %v243, %v2257
        %2259 = vmatprep.subr.mxu0 %v2258
        %v2260 = vand.u32 %v242, 4294901760
        %v2261 = vsub.f32 %v242, %v2260
        %2262 = vmatpush1.msra.mxu0 %v2261
        %v2263 = vand.u32 %v245, 4294901760
        %v2264 = vsub.f32 %v245, %v2263
        %2265 = vmatprep.subr.mxu0 %v2264
        %v2266 = vand.u32 %v244, 4294901760
        %v2267 = vsub.f32 %v244, %v2266
        %2268 = vmatpush1.msra.mxu0 %v2267
        %v2269 = vand.u32 %v247, 4294901760
        %v2270 = vsub.f32 %v247, %v2269
        %2271 = vmatprep.subr.mxu0 %v2270
        %v2272 = vand.u32 %v246, 4294901760
        %v2273 = vsub.f32 %v246, %v2272
        %2274 = vmatpush1.msra.mxu0 %v2273
        %v2275 = vand.u32 %v249, 4294901760
        %v2276 = vsub.f32 %v249, %v2275
        %2277 = vmatprep.subr.mxu0 %v2276
        %v2278 = vand.u32 %v248, 4294901760
        %v2279 = vsub.f32 %v248, %v2278
        %2280 = vmatpush1.msra.mxu0 %v2279
        %v2281 = vand.u32 %v251, 4294901760
        %v2282 = vsub.f32 %v251, %v2281
        %2283 = vmatprep.subr.mxu0 %v2282
        %v2284 = vand.u32 %v250, 4294901760
        %v2285 = vsub.f32 %v250, %v2284
        %2286 = vmatpush1.msra.mxu0 %v2285
        %v2287 = vand.u32 %v253, 4294901760
        %v2288 = vsub.f32 %v253, %v2287
        %2289 = vmatprep.subr.mxu0 %v2288
        %v2290 = vand.u32 %v252, 4294901760
        %v2291 = vsub.f32 %v252, %v2290
        %2292 = vmatpush1.msra.mxu0 %v2291
        %v2293 = vand.u32 %v255, 4294901760
        %v2294 = vsub.f32 %v255, %v2293
        %2295 = vmatprep.subr.mxu0 %v2294
        %v2296 = vand.u32 %v254, 4294901760
        %v2297 = vsub.f32 %v254, %v2296
        %2298 = vmatpush1.msra.mxu0 %v2297
        %v2299 = vand.u32 %v257, 4294901760
        %v2300 = vsub.f32 %v257, %v2299
        %2301 = vmatprep.subr.mxu0 %v2300
        %v2302 = vand.u32 %v256, 4294901760
        %v2303 = vsub.f32 %v256, %v2302
        %2304 = vmatpush1.msra.mxu0 %v2303
        %v2305 = vand.u32 %v259, 4294901760
        %v2306 = vsub.f32 %v259, %v2305
        %2307 = vmatprep.subr.mxu0 %v2306
        %v2308 = vand.u32 %v258, 4294901760
        %v2309 = vsub.f32 %v258, %v2308
        %2310 = vmatpush1.msra.mxu0 %v2309
        %v2311 = vand.u32 %v261, 4294901760
        %v2312 = vsub.f32 %v261, %v2311
        %2313 = vmatprep.subr.mxu0 %v2312
        %v2314 = vand.u32 %v260, 4294901760
        %v2315 = vsub.f32 %v260, %v2314
        %2316 = vmatpush1.msra.mxu0 %v2315
        %v2317 = vand.u32 %v263, 4294901760
        %v2318 = vsub.f32 %v263, %v2317
        %2319 = vmatprep.subr.mxu0 %v2318
        %v2320 = vand.u32 %v262, 4294901760
        %v2321 = vsub.f32 %v262, %v2320
        %2322 = vmatpush1.msra.mxu0 %v2321
        %v2323 = vand.u32 %v265, 4294901760
        %v2324 = vsub.f32 %v265, %v2323
        %2325 = vmatprep.subr.mxu0 %v2324
        %v2326 = vand.u32 %v264, 4294901760
        %v2327 = vsub.f32 %v264, %v2326
        %2328 = vmatpush1.msra.mxu0 %v2327
        %v2329 = vand.u32 %v267, 4294901760
        %v2330 = vsub.f32 %v267, %v2329
        %2331 = vmatprep.subr.mxu0 %v2330
        %v2332 = vand.u32 %v266, 4294901760
        %v2333 = vsub.f32 %v266, %v2332
        %2334 = vmatpush1.msra.mxu0 %v2333
        %v2335 = vand.u32 %v269, 4294901760
        %v2336 = vsub.f32 %v269, %v2335
        %2337 = vmatprep.subr.mxu0 %v2336
        %v2338 = vand.u32 %v268, 4294901760
        %v2339 = vsub.f32 %v268, %v2338
        %2340 = vmatpush1.msra.mxu0 %v2339
        %v2341 = vand.u32 %v271, 4294901760
        %v2342 = vsub.f32 %v271, %v2341
        %2343 = vmatprep.subr.mxu0 %v2342
        %v2344 = vand.u32 %v270, 4294901760
        %v2345 = vsub.f32 %v270, %v2344
        %2346 = vmatpush1.msra.mxu0 %v2345
        %v2347 = vand.u32 %v273, 4294901760
        %v2348 = vsub.f32 %v273, %v2347
        %2349 = vmatprep.subr.mxu0 %v2348
        %v2350 = vand.u32 %v272, 4294901760
        %v2351 = vsub.f32 %v272, %v2350
        %2352 = vmatpush1.msra.mxu0 %v2351
        %v2353 = vand.u32 %v209, 4294901760
        %v2354 = vsub.f32 %v209, %v2353
        %2355 = vmatprep.mubr.f32.mxu0 %v2354
        %v2356 = vand.u32 %v208, 4294901760
        %v2357 = vsub.f32 %v208, %v2356
        %2358 = vmatmul.mubr.f32.gmra.mrb[0].mxu0 %v2357
        %v2359 = vpop.f32.mrb[0].mxu0
        %v2360 = vadd.f32 %v2157, %v2359
        %v2361 = vpop.f32.mrb[0].mxu0
        %v2362 = vadd.f32 %v2159, %v2361
        %2363 = vdwg.mxu0
        %v2364 = vand.u32 %v211, 4294901760
        %2365 = vmatprep.subr.mxu0 %v2364
        %v2366 = vand.u32 %v210, 4294901760
        %2367 = vmatpush1.msra.mxu0 %v2366
        %v2368 = vand.u32 %v213, 4294901760
        %2369 = vmatprep.subr.mxu0 %v2368
        %v2370 = vand.u32 %v212, 4294901760
        %2371 = vmatpush1.msra.mxu0 %v2370
        %v2372 = vand.u32 %v215, 4294901760
        %2373 = vmatprep.subr.mxu0 %v2372
        %v2374 = vand.u32 %v214, 4294901760
        %2375 = vmatpush1.msra.mxu0 %v2374
        %v2376 = vand.u32 %v217, 4294901760
        %2377 = vmatprep.subr.mxu0 %v2376
        %v2378 = vand.u32 %v216, 4294901760
        %2379 = vmatpush1.msra.mxu0 %v2378
        %v2380 = vand.u32 %v219, 4294901760
        %2381 = vmatprep.subr.mxu0 %v2380
        %v2382 = vand.u32 %v218, 4294901760
        %2383 = vmatpush1.msra.mxu0 %v2382
        %v2384 = vand.u32 %v221, 4294901760
        %2385 = vmatprep.subr.mxu0 %v2384
        %v2386 = vand.u32 %v220, 4294901760
        %2387 = vmatpush1.msra.mxu0 %v2386
        %v2388 = vand.u32 %v223, 4294901760
        %2389 = vmatprep.subr.mxu0 %v2388
        %v2390 = vand.u32 %v222, 4294901760
        %2391 = vmatpush1.msra.mxu0 %v2390
        %v2392 = vand.u32 %v225, 4294901760
        %2393 = vmatprep.subr.mxu0 %v2392
        %v2394 = vand.u32 %v224, 4294901760
        %2395 = vmatpush1.msra.mxu0 %v2394
        %v2396 = vand.u32 %v227, 4294901760
        %2397 = vmatprep.subr.mxu0 %v2396
        %v2398 = vand.u32 %v226, 4294901760
        %2399 = vmatpush1.msra.mxu0 %v2398
        %v2400 = vand.u32 %v229, 4294901760
        %2401 = vmatprep.subr.mxu0 %v2400
        %v2402 = vand.u32 %v228, 4294901760
        %2403 = vmatpush1.msra.mxu0 %v2402
        %v2404 = vand.u32 %v231, 4294901760
        %2405 = vmatprep.subr.mxu0 %v2404
        %v2406 = vand.u32 %v230, 4294901760
        %2407 = vmatpush1.msra.mxu0 %v2406
        %v2408 = vand.u32 %v233, 4294901760
        %2409 = vmatprep.subr.mxu0 %v2408
        %v2410 = vand.u32 %v232, 4294901760
        %2411 = vmatpush1.msra.mxu0 %v2410
        %v2412 = vand.u32 %v235, 4294901760
        %2413 = vmatprep.subr.mxu0 %v2412
        %v2414 = vand.u32 %v234, 4294901760
        %2415 = vmatpush1.msra.mxu0 %v2414
        %v2416 = vand.u32 %v237, 4294901760
        %2417 = vmatprep.subr.mxu0 %v2416
        %v2418 = vand.u32 %v236, 4294901760
        %2419 = vmatpush1.msra.mxu0 %v2418
        %v2420 = vand.u32 %v239, 4294901760
        %2421 = vmatprep.subr.mxu0 %v2420
        %v2422 = vand.u32 %v238, 4294901760
        %2423 = vmatpush1.msra.mxu0 %v2422
        %v2424 = vand.u32 %v241, 4294901760
        %2425 = vmatprep.subr.mxu0 %v2424
        %v2426 = vand.u32 %v240, 4294901760
        %2427 = vmatpush1.msra.mxu0 %v2426
        %v2428 = vand.u32 %v243, 4294901760
        %2429 = vmatprep.subr.mxu0 %v2428
        %v2430 = vand.u32 %v242, 4294901760
        %2431 = vmatpush1.msra.mxu0 %v2430
        %v2432 = vand.u32 %v245, 4294901760
        %2433 = vmatprep.subr.mxu0 %v2432
        %v2434 = vand.u32 %v244, 4294901760
        %2435 = vmatpush1.msra.mxu0 %v2434
        %v2436 = vand.u32 %v247, 4294901760
        %2437 = vmatprep.subr.mxu0 %v2436
        %v2438 = vand.u32 %v246, 4294901760
        %2439 = vmatpush1.msra.mxu0 %v2438
        %v2440 = vand.u32 %v249, 4294901760
        %2441 = vmatprep.subr.mxu0 %v2440
        %v2442 = vand.u32 %v248, 4294901760
        %2443 = vmatpush1.msra.mxu0 %v2442
        %v2444 = vand.u32 %v251, 4294901760
        %2445 = vmatprep.subr.mxu0 %v2444
        %v2446 = vand.u32 %v250, 4294901760
        %2447 = vmatpush1.msra.mxu0 %v2446
        %v2448 = vand.u32 %v253, 4294901760
        %2449 = vmatprep.subr.mxu0 %v2448
        %v2450 = vand.u32 %v252, 4294901760
        %2451 = vmatpush1.msra.mxu0 %v2450
        %v2452 = vand.u32 %v255, 4294901760
        %2453 = vmatprep.subr.mxu0 %v2452
        %v2454 = vand.u32 %v254, 4294901760
        %2455 = vmatpush1.msra.mxu0 %v2454
        %v2456 = vand.u32 %v257, 4294901760
        %2457 = vmatprep.subr.mxu0 %v2456
        %v2458 = vand.u32 %v256, 4294901760
        %2459 = vmatpush1.msra.mxu0 %v2458
        %v2460 = vand.u32 %v259, 4294901760
        %2461 = vmatprep.subr.mxu0 %v2460
        %v2462 = vand.u32 %v258, 4294901760
        %2463 = vmatpush1.msra.mxu0 %v2462
        %v2464 = vand.u32 %v261, 4294901760
        %2465 = vmatprep.subr.mxu0 %v2464
        %v2466 = vand.u32 %v260, 4294901760
        %2467 = vmatpush1.msra.mxu0 %v2466
        %v2468 = vand.u32 %v263, 4294901760
        %2469 = vmatprep.subr.mxu0 %v2468
        %v2470 = vand.u32 %v262, 4294901760
        %2471 = vmatpush1.msra.mxu0 %v2470
        %v2472 = vand.u32 %v265, 4294901760
        %2473 = vmatprep.subr.mxu0 %v2472
        %v2474 = vand.u32 %v264, 4294901760
        %2475 = vmatpush1.msra.mxu0 %v2474
        %v2476 = vand.u32 %v267, 4294901760
        %2477 = vmatprep.subr.mxu0 %v2476
        %v2478 = vand.u32 %v266, 4294901760
        %2479 = vmatpush1.msra.mxu0 %v2478
        %v2480 = vand.u32 %v269, 4294901760
        %2481 = vmatprep.subr.mxu0 %v2480
        %v2482 = vand.u32 %v268, 4294901760
        %2483 = vmatpush1.msra.mxu0 %v2482
        %v2484 = vand.u32 %v271, 4294901760
        %2485 = vmatprep.subr.mxu0 %v2484
        %v2486 = vand.u32 %v270, 4294901760
        %2487 = vmatpush1.msra.mxu0 %v2486
        %v2488 = vand.u32 %v273, 4294901760
        %2489 = vmatprep.subr.mxu0 %v2488
        %v2490 = vand.u32 %v272, 4294901760
        %2491 = vmatpush1.msra.mxu0 %v2490
        %v2492 = vand.u32 %v209, 4294901760
        %v2493 = vsub.f32 %v209, %v2492
        %v2494 = vand.u32 %v2493, 4294901760
        %2495 = vmatprep.mubr.f32.mxu0 %v2494
        %v2496 = vand.u32 %v208, 4294901760
        %v2497 = vsub.f32 %v208, %v2496
        %v2498 = vand.u32 %v2497, 4294901760
        %2499 = vmatmul.mubr.f32.gmra.mrb[0].mxu0 %v2498
        %v2500 = vpop.f32.mrb[0].mxu0
        %v2501 = vadd.f32 %v2360, %v2500
        %v2502 = vpop.f32.mrb[0].mxu0
        %v2503 = vadd.f32 %v2362, %v2502
        %2504 = vdwg.mxu0
        %v2505 = vand.u32 %v211, 4294901760
        %v2506 = vsub.f32 %v211, %v2505
        %v2507 = vand.u32 %v2506, 4294901760
        %2508 = vmatprep.subr.mxu0 %v2507
        %v2509 = vand.u32 %v210, 4294901760
        %v2510 = vsub.f32 %v210, %v2509
        %v2511 = vand.u32 %v2510, 4294901760
        %2512 = vmatpush1.msra.mxu0 %v2511
        %v2513 = vand.u32 %v213, 4294901760
        %v2514 = vsub.f32 %v213, %v2513
        %v2515 = vand.u32 %v2514, 4294901760
        %2516 = vmatprep.subr.mxu0 %v2515
        %v2517 = vand.u32 %v212, 4294901760
        %v2518 = vsub.f32 %v212, %v2517
        %v2519 = vand.u32 %v2518, 4294901760
        %2520 = vmatpush1.msra.mxu0 %v2519
        %v2521 = vand.u32 %v215, 4294901760
        %v2522 = vsub.f32 %v215, %v2521
        %v2523 = vand.u32 %v2522, 4294901760
        %2524 = vmatprep.subr.mxu0 %v2523
        %v2525 = vand.u32 %v214, 4294901760
        %v2526 = vsub.f32 %v214, %v2525
        %v2527 = vand.u32 %v2526, 4294901760
        %2528 = vmatpush1.msra.mxu0 %v2527
        %v2529 = vand.u32 %v217, 4294901760
        %v2530 = vsub.f32 %v217, %v2529
        %v2531 = vand.u32 %v2530, 4294901760
        %2532 = vmatprep.subr.mxu0 %v2531
        %v2533 = vand.u32 %v216, 4294901760
        %v2534 = vsub.f32 %v216, %v2533
        %v2535 = vand.u32 %v2534, 4294901760
        %2536 = vmatpush1.msra.mxu0 %v2535
        %v2537 = vand.u32 %v219, 4294901760
        %v2538 = vsub.f32 %v219, %v2537
        %v2539 = vand.u32 %v2538, 4294901760
        %2540 = vmatprep.subr.mxu0 %v2539
        %v2541 = vand.u32 %v218, 4294901760
        %v2542 = vsub.f32 %v218, %v2541
        %v2543 = vand.u32 %v2542, 4294901760
        %2544 = vmatpush1.msra.mxu0 %v2543
        %v2545 = vand.u32 %v221, 4294901760
        %v2546 = vsub.f32 %v221, %v2545
        %v2547 = vand.u32 %v2546, 4294901760
        %2548 = vmatprep.subr.mxu0 %v2547
        %v2549 = vand.u32 %v220, 4294901760
        %v2550 = vsub.f32 %v220, %v2549
        %v2551 = vand.u32 %v2550, 4294901760
        %2552 = vmatpush1.msra.mxu0 %v2551
        %v2553 = vand.u32 %v223, 4294901760
        %v2554 = vsub.f32 %v223, %v2553
        %v2555 = vand.u32 %v2554, 4294901760
        %2556 = vmatprep.subr.mxu0 %v2555
        %v2557 = vand.u32 %v222, 4294901760
        %v2558 = vsub.f32 %v222, %v2557
        %v2559 = vand.u32 %v2558, 4294901760
        %2560 = vmatpush1.msra.mxu0 %v2559
        %v2561 = vand.u32 %v225, 4294901760
        %v2562 = vsub.f32 %v225, %v2561
        %v2563 = vand.u32 %v2562, 4294901760
        %2564 = vmatprep.subr.mxu0 %v2563
        %v2565 = vand.u32 %v224, 4294901760
        %v2566 = vsub.f32 %v224, %v2565
        %v2567 = vand.u32 %v2566, 4294901760
        %2568 = vmatpush1.msra.mxu0 %v2567
        %v2569 = vand.u32 %v227, 4294901760
        %v2570 = vsub.f32 %v227, %v2569
        %v2571 = vand.u32 %v2570, 4294901760
        %2572 = vmatprep.subr.mxu0 %v2571
        %v2573 = vand.u32 %v226, 4294901760
        %v2574 = vsub.f32 %v226, %v2573
        %v2575 = vand.u32 %v2574, 4294901760
        %2576 = vmatpush1.msra.mxu0 %v2575
        %v2577 = vand.u32 %v229, 4294901760
        %v2578 = vsub.f32 %v229, %v2577
        %v2579 = vand.u32 %v2578, 4294901760
        %2580 = vmatprep.subr.mxu0 %v2579
        %v2581 = vand.u32 %v228, 4294901760
        %v2582 = vsub.f32 %v228, %v2581
        %v2583 = vand.u32 %v2582, 4294901760
        %2584 = vmatpush1.msra.mxu0 %v2583
        %v2585 = vand.u32 %v231, 4294901760
        %v2586 = vsub.f32 %v231, %v2585
        %v2587 = vand.u32 %v2586, 4294901760
        %2588 = vmatprep.subr.mxu0 %v2587
        %v2589 = vand.u32 %v230, 4294901760
        %v2590 = vsub.f32 %v230, %v2589
        %v2591 = vand.u32 %v2590, 4294901760
        %2592 = vmatpush1.msra.mxu0 %v2591
        %v2593 = vand.u32 %v233, 4294901760
        %v2594 = vsub.f32 %v233, %v2593
        %v2595 = vand.u32 %v2594, 4294901760
        %2596 = vmatprep.subr.mxu0 %v2595
        %v2597 = vand.u32 %v232, 4294901760
        %v2598 = vsub.f32 %v232, %v2597
        %v2599 = vand.u32 %v2598, 4294901760
        %2600 = vmatpush1.msra.mxu0 %v2599
        %v2601 = vand.u32 %v235, 4294901760
        %v2602 = vsub.f32 %v235, %v2601
        %v2603 = vand.u32 %v2602, 4294901760
        %2604 = vmatprep.subr.mxu0 %v2603
        %v2605 = vand.u32 %v234, 4294901760
        %v2606 = vsub.f32 %v234, %v2605
        %v2607 = vand.u32 %v2606, 4294901760
        %2608 = vmatpush1.msra.mxu0 %v2607
        %v2609 = vand.u32 %v237, 4294901760
        %v2610 = vsub.f32 %v237, %v2609
        %v2611 = vand.u32 %v2610, 4294901760
        %2612 = vmatprep.subr.mxu0 %v2611
        %v2613 = vand.u32 %v236, 4294901760
        %v2614 = vsub.f32 %v236, %v2613
        %v2615 = vand.u32 %v2614, 4294901760
        %2616 = vmatpush1.msra.mxu0 %v2615
        %v2617 = vand.u32 %v239, 4294901760
        %v2618 = vsub.f32 %v239, %v2617
        %v2619 = vand.u32 %v2618, 4294901760
        %2620 = vmatprep.subr.mxu0 %v2619
        %v2621 = vand.u32 %v238, 4294901760
        %v2622 = vsub.f32 %v238, %v2621
        %v2623 = vand.u32 %v2622, 4294901760
        %2624 = vmatpush1.msra.mxu0 %v2623
        %v2625 = vand.u32 %v241, 4294901760
        %v2626 = vsub.f32 %v241, %v2625
        %v2627 = vand.u32 %v2626, 4294901760
        %2628 = vmatprep.subr.mxu0 %v2627
        %v2629 = vand.u32 %v240, 4294901760
        %v2630 = vsub.f32 %v240, %v2629
        %v2631 = vand.u32 %v2630, 4294901760
        %2632 = vmatpush1.msra.mxu0 %v2631
        %v2633 = vand.u32 %v243, 4294901760
        %v2634 = vsub.f32 %v243, %v2633
        %v2635 = vand.u32 %v2634, 4294901760
        %2636 = vmatprep.subr.mxu0 %v2635
        %v2637 = vand.u32 %v242, 4294901760
        %v2638 = vsub.f32 %v242, %v2637
        %v2639 = vand.u32 %v2638, 4294901760
        %2640 = vmatpush1.msra.mxu0 %v2639
        %v2641 = vand.u32 %v245, 4294901760
        %v2642 = vsub.f32 %v245, %v2641
        %v2643 = vand.u32 %v2642, 4294901760
        %2644 = vmatprep.subr.mxu0 %v2643
        %v2645 = vand.u32 %v244, 4294901760
        %v2646 = vsub.f32 %v244, %v2645
        %v2647 = vand.u32 %v2646, 4294901760
        %2648 = vmatpush1.msra.mxu0 %v2647
        %v2649 = vand.u32 %v247, 4294901760
        %v2650 = vsub.f32 %v247, %v2649
        %v2651 = vand.u32 %v2650, 4294901760
        %2652 = vmatprep.subr.mxu0 %v2651
        %v2653 = vand.u32 %v246, 4294901760
        %v2654 = vsub.f32 %v246, %v2653
        %v2655 = vand.u32 %v2654, 4294901760
        %2656 = vmatpush1.msra.mxu0 %v2655
        %v2657 = vand.u32 %v249, 4294901760
        %v2658 = vsub.f32 %v249, %v2657
        %v2659 = vand.u32 %v2658, 4294901760
        %2660 = vmatprep.subr.mxu0 %v2659
        %v2661 = vand.u32 %v248, 4294901760
        %v2662 = vsub.f32 %v248, %v2661
        %v2663 = vand.u32 %v2662, 4294901760
        %2664 = vmatpush1.msra.mxu0 %v2663
        %v2665 = vand.u32 %v251, 4294901760
        %v2666 = vsub.f32 %v251, %v2665
        %v2667 = vand.u32 %v2666, 4294901760
        %2668 = vmatprep.subr.mxu0 %v2667
        %v2669 = vand.u32 %v250, 4294901760
        %v2670 = vsub.f32 %v250, %v2669
        %v2671 = vand.u32 %v2670, 4294901760
        %2672 = vmatpush1.msra.mxu0 %v2671
        %v2673 = vand.u32 %v253, 4294901760
        %v2674 = vsub.f32 %v253, %v2673
        %v2675 = vand.u32 %v2674, 4294901760
        %2676 = vmatprep.subr.mxu0 %v2675
        %v2677 = vand.u32 %v252, 4294901760
        %v2678 = vsub.f32 %v252, %v2677
        %v2679 = vand.u32 %v2678, 4294901760
        %2680 = vmatpush1.msra.mxu0 %v2679
        %v2681 = vand.u32 %v255, 4294901760
        %v2682 = vsub.f32 %v255, %v2681
        %v2683 = vand.u32 %v2682, 4294901760
        %2684 = vmatprep.subr.mxu0 %v2683
        %v2685 = vand.u32 %v254, 4294901760
        %v2686 = vsub.f32 %v254, %v2685
        %v2687 = vand.u32 %v2686, 4294901760
        %2688 = vmatpush1.msra.mxu0 %v2687
        %v2689 = vand.u32 %v257, 4294901760
        %v2690 = vsub.f32 %v257, %v2689
        %v2691 = vand.u32 %v2690, 4294901760
        %2692 = vmatprep.subr.mxu0 %v2691
        %v2693 = vand.u32 %v256, 4294901760
        %v2694 = vsub.f32 %v256, %v2693
        %v2695 = vand.u32 %v2694, 4294901760
        %2696 = vmatpush1.msra.mxu0 %v2695
        %v2697 = vand.u32 %v259, 4294901760
        %v2698 = vsub.f32 %v259, %v2697
        %v2699 = vand.u32 %v2698, 4294901760
        %2700 = vmatprep.subr.mxu0 %v2699
        %v2701 = vand.u32 %v258, 4294901760
        %v2702 = vsub.f32 %v258, %v2701
        %v2703 = vand.u32 %v2702, 4294901760
        %2704 = vmatpush1.msra.mxu0 %v2703
        %v2705 = vand.u32 %v261, 4294901760
        %v2706 = vsub.f32 %v261, %v2705
        %v2707 = vand.u32 %v2706, 4294901760
        %2708 = vmatprep.subr.mxu0 %v2707
        %v2709 = vand.u32 %v260, 4294901760
        %v2710 = vsub.f32 %v260, %v2709
        %v2711 = vand.u32 %v2710, 4294901760
        %2712 = vmatpush1.msra.mxu0 %v2711
        %v2713 = vand.u32 %v263, 4294901760
        %v2714 = vsub.f32 %v263, %v2713
        %v2715 = vand.u32 %v2714, 4294901760
        %2716 = vmatprep.subr.mxu0 %v2715
        %v2717 = vand.u32 %v262, 4294901760
        %v2718 = vsub.f32 %v262, %v2717
        %v2719 = vand.u32 %v2718, 4294901760
        %2720 = vmatpush1.msra.mxu0 %v2719
        %v2721 = vand.u32 %v265, 4294901760
        %v2722 = vsub.f32 %v265, %v2721
        %v2723 = vand.u32 %v2722, 4294901760
        %2724 = vmatprep.subr.mxu0 %v2723
        %v2725 = vand.u32 %v264, 4294901760
        %v2726 = vsub.f32 %v264, %v2725
        %v2727 = vand.u32 %v2726, 4294901760
        %2728 = vmatpush1.msra.mxu0 %v2727
        %v2729 = vand.u32 %v267, 4294901760
        %v2730 = vsub.f32 %v267, %v2729
        %v2731 = vand.u32 %v2730, 4294901760
        %2732 = vmatprep.subr.mxu0 %v2731
        %v2733 = vand.u32 %v266, 4294901760
        %v2734 = vsub.f32 %v266, %v2733
        %v2735 = vand.u32 %v2734, 4294901760
        %2736 = vmatpush1.msra.mxu0 %v2735
        %v2737 = vand.u32 %v269, 4294901760
        %v2738 = vsub.f32 %v269, %v2737
        %v2739 = vand.u32 %v2738, 4294901760
        %2740 = vmatprep.subr.mxu0 %v2739
        %v2741 = vand.u32 %v268, 4294901760
        %v2742 = vsub.f32 %v268, %v2741
        %v2743 = vand.u32 %v2742, 4294901760
        %2744 = vmatpush1.msra.mxu0 %v2743
        %v2745 = vand.u32 %v271, 4294901760
        %v2746 = vsub.f32 %v271, %v2745
        %v2747 = vand.u32 %v2746, 4294901760
        %2748 = vmatprep.subr.mxu0 %v2747
        %v2749 = vand.u32 %v270, 4294901760
        %v2750 = vsub.f32 %v270, %v2749
        %v2751 = vand.u32 %v2750, 4294901760
        %2752 = vmatpush1.msra.mxu0 %v2751
        %v2753 = vand.u32 %v273, 4294901760
        %v2754 = vsub.f32 %v273, %v2753
        %v2755 = vand.u32 %v2754, 4294901760
        %2756 = vmatprep.subr.mxu0 %v2755
        %v2757 = vand.u32 %v272, 4294901760
        %v2758 = vsub.f32 %v272, %v2757
        %v2759 = vand.u32 %v2758, 4294901760
        %2760 = vmatpush1.msra.mxu0 %v2759
        %v2761 = vand.u32 %v209, 4294901760
        %2762 = vmatprep.mubr.f32.mxu0 %v2761
        %v2763 = vand.u32 %v208, 4294901760
        %2764 = vmatmul.mubr.f32.gmra.mrb[0].mxu0 %v2763
        %v2765 = vpop.f32.mrb[0].mxu0
        %v2766 = vadd.f32 %v2501, %v2765
        %v2767 = vpop.f32.mrb[0].mxu0
        %v2768 = vadd.f32 %v2503, %v2767
        %2769 = vdwg.mxu0
        %v2770 = vand.u32 %v211, 4294901760
        %2771 = vmatprep.subr.mxu0 %v2770
        %v2772 = vand.u32 %v210, 4294901760
        %2773 = vmatpush1.msra.mxu0 %v2772
        %v2774 = vand.u32 %v213, 4294901760
        %2775 = vmatprep.subr.mxu0 %v2774
        %v2776 = vand.u32 %v212, 4294901760
        %2777 = vmatpush1.msra.mxu0 %v2776
        %v2778 = vand.u32 %v215, 4294901760
        %2779 = vmatprep.subr.mxu0 %v2778
        %v2780 = vand.u32 %v214, 4294901760
        %2781 = vmatpush1.msra.mxu0 %v2780
        %v2782 = vand.u32 %v217, 4294901760
        %2783 = vmatprep.subr.mxu0 %v2782
        %v2784 = vand.u32 %v216, 4294901760
        %2785 = vmatpush1.msra.mxu0 %v2784
        %v2786 = vand.u32 %v219, 4294901760
        %2787 = vmatprep.subr.mxu0 %v2786
        %v2788 = vand.u32 %v218, 4294901760
        %2789 = vmatpush1.msra.mxu0 %v2788
        %v2790 = vand.u32 %v221, 4294901760
        %2791 = vmatprep.subr.mxu0 %v2790
        %v2792 = vand.u32 %v220, 4294901760
        %2793 = vmatpush1.msra.mxu0 %v2792
        %v2794 = vand.u32 %v223, 4294901760
        %2795 = vmatprep.subr.mxu0 %v2794
        %v2796 = vand.u32 %v222, 4294901760
        %2797 = vmatpush1.msra.mxu0 %v2796
        %v2798 = vand.u32 %v225, 4294901760
        %2799 = vmatprep.subr.mxu0 %v2798
        %v2800 = vand.u32 %v224, 4294901760
        %2801 = vmatpush1.msra.mxu0 %v2800
        %v2802 = vand.u32 %v227, 4294901760
        %2803 = vmatprep.subr.mxu0 %v2802
        %v2804 = vand.u32 %v226, 4294901760
        %2805 = vmatpush1.msra.mxu0 %v2804
        %v2806 = vand.u32 %v229, 4294901760
        %2807 = vmatprep.subr.mxu0 %v2806
        %v2808 = vand.u32 %v228, 4294901760
        %2809 = vmatpush1.msra.mxu0 %v2808
        %v2810 = vand.u32 %v231, 4294901760
        %2811 = vmatprep.subr.mxu0 %v2810
        %v2812 = vand.u32 %v230, 4294901760
        %2813 = vmatpush1.msra.mxu0 %v2812
        %v2814 = vand.u32 %v233, 4294901760
        %2815 = vmatprep.subr.mxu0 %v2814
        %v2816 = vand.u32 %v232, 4294901760
        %2817 = vmatpush1.msra.mxu0 %v2816
        %v2818 = vand.u32 %v235, 4294901760
        %2819 = vmatprep.subr.mxu0 %v2818
        %v2820 = vand.u32 %v234, 4294901760
        %2821 = vmatpush1.msra.mxu0 %v2820
        %v2822 = vand.u32 %v237, 4294901760
        %2823 = vmatprep.subr.mxu0 %v2822
        %v2824 = vand.u32 %v236, 4294901760
        %2825 = vmatpush1.msra.mxu0 %v2824
        %v2826 = vand.u32 %v239, 4294901760
        %2827 = vmatprep.subr.mxu0 %v2826
        %v2828 = vand.u32 %v238, 4294901760
        %2829 = vmatpush1.msra.mxu0 %v2828
        %v2830 = vand.u32 %v241, 4294901760
        %2831 = vmatprep.subr.mxu0 %v2830
        %v2832 = vand.u32 %v240, 4294901760
        %2833 = vmatpush1.msra.mxu0 %v2832
        %v2834 = vand.u32 %v243, 4294901760
        %2835 = vmatprep.subr.mxu0 %v2834
        %v2836 = vand.u32 %v242, 4294901760
        %2837 = vmatpush1.msra.mxu0 %v2836
        %v2838 = vand.u32 %v245, 4294901760
        %2839 = vmatprep.subr.mxu0 %v2838
        %v2840 = vand.u32 %v244, 4294901760
        %2841 = vmatpush1.msra.mxu0 %v2840
        %v2842 = vand.u32 %v247, 4294901760
        %2843 = vmatprep.subr.mxu0 %v2842
        %v2844 = vand.u32 %v246, 4294901760
        %2845 = vmatpush1.msra.mxu0 %v2844
        %v2846 = vand.u32 %v249, 4294901760
        %2847 = vmatprep.subr.mxu0 %v2846
        %v2848 = vand.u32 %v248, 4294901760
        %2849 = vmatpush1.msra.mxu0 %v2848
        %v2850 = vand.u32 %v251, 4294901760
        %2851 = vmatprep.subr.mxu0 %v2850
        %v2852 = vand.u32 %v250, 4294901760
        %2853 = vmatpush1.msra.mxu0 %v2852
        %v2854 = vand.u32 %v253, 4294901760
        %2855 = vmatprep.subr.mxu0 %v2854
        %v2856 = vand.u32 %v252, 4294901760
        %2857 = vmatpush1.msra.mxu0 %v2856
        %v2858 = vand.u32 %v255, 4294901760
        %2859 = vmatprep.subr.mxu0 %v2858
        %v2860 = vand.u32 %v254, 4294901760
        %2861 = vmatpush1.msra.mxu0 %v2860
        %v2862 = vand.u32 %v257, 4294901760
        %2863 = vmatprep.subr.mxu0 %v2862
        %v2864 = vand.u32 %v256, 4294901760
        %2865 = vmatpush1.msra.mxu0 %v2864
        %v2866 = vand.u32 %v259, 4294901760
        %2867 = vmatprep.subr.mxu0 %v2866
        %v2868 = vand.u32 %v258, 4294901760
        %2869 = vmatpush1.msra.mxu0 %v2868
        %v2870 = vand.u32 %v261, 4294901760
        %2871 = vmatprep.subr.mxu0 %v2870
        %v2872 = vand.u32 %v260, 4294901760
        %2873 = vmatpush1.msra.mxu0 %v2872
        %v2874 = vand.u32 %v263, 4294901760
        %2875 = vmatprep.subr.mxu0 %v2874
        %v2876 = vand.u32 %v262, 4294901760
        %2877 = vmatpush1.msra.mxu0 %v2876
        %v2878 = vand.u32 %v265, 4294901760
        %2879 = vmatprep.subr.mxu0 %v2878
        %v2880 = vand.u32 %v264, 4294901760
        %2881 = vmatpush1.msra.mxu0 %v2880
        %v2882 = vand.u32 %v267, 4294901760
        %2883 = vmatprep.subr.mxu0 %v2882
        %v2884 = vand.u32 %v266, 4294901760
        %2885 = vmatpush1.msra.mxu0 %v2884
        %v2886 = vand.u32 %v269, 4294901760
        %2887 = vmatprep.subr.mxu0 %v2886
        %v2888 = vand.u32 %v268, 4294901760
        %2889 = vmatpush1.msra.mxu0 %v2888
        %v2890 = vand.u32 %v271, 4294901760
        %2891 = vmatprep.subr.mxu0 %v2890
        %v2892 = vand.u32 %v270, 4294901760
        %2893 = vmatpush1.msra.mxu0 %v2892
        %v2894 = vand.u32 %v273, 4294901760
        %2895 = vmatprep.subr.mxu0 %v2894
        %v2896 = vand.u32 %v272, 4294901760
        %2897 = vmatpush1.msra.mxu0 %v2896
        %v2898 = vand.u32 %v209, 4294901760
        %2899 = vmatprep.mubr.f32.mxu0 %v2898
        %v2900 = vand.u32 %v208, 4294901760
        %2901 = vmatmul.mubr.f32.gmra.mrb[0].mxu0 %v2900
        %v2902 = vpop.f32.mrb[0].mxu0
        %v2903 = vadd.f32 %v2766, %v2902
        %v2904 = vpop.f32.mrb[0].mxu0
        %v2905 = vadd.f32 %v2768, %v2904
        %2906 = vdwg.mxu0
        %v2909 = vcombine.low %v2903, %v2905
        %v2911 = vunpack.c.l.s4 1966171168
        %v2912 = vunpack.c.0.s8 %v2911
        %v2913 = vlaneseq
        %v2914 = vshrl.u32 %v2913, 7
        %v2915 = vsub.s32 %v2912, %v2914
        %v2916 = vrot.slane %v2909, %v2915
        %v2918 = vunpack.c.l.s4 1966171168
        %v2919 = vunpack.c.0.s8 %v2918
        %v2920 = vlaneseq
        %v2921 = vshrl.u32 %v2920, 7
        %v2922 = vsub.s32 %v2919, %v2921
        %v2923 = vrot.slane %v2916, %v2922
        %v2925 = vlaneseq
        %vm2926 = vcmp.ge.s32.totalorder %v2925, 0
        %vm2927 = vcmp.lt.s32.totalorder %v2925, 256
        %vm2928 = vmand %vm2926, %vm2927
        %2929 = vst.msk [vmem:[%s174] sm:$0x3] %vm2928, %v2923
        %s2930 = sand.u32 %s75, 1
        %s2931 = scalar_lea.sflag [#allocation4], %s2930
        %s2932 = sand.u32 %s75, 1
        %s2933 = smul.addr %s2932, 2
        %s2934 = scalar_lea.vmem [#allocation7], %s2933
        // Predicated region
        $region37: #{tpu_custom_call.1} parent=27 // pred_check
          %p2935 = pneg %p85
        $region38: #{tpu_custom_call.1} parent=27 // pred_check_branch
          %2937 = sbr.rel (%p2935) target = $region40
        $region39: #{tpu_custom_call.1} parent=27 // pred_region
          %s2939 = ssub.s32 32, 32
          %2940 = vsyncadd %s2931, %s2939
          %s2941 = smul.addr %s20, 2
          %s2942 = smul.addr %s2941, 16
          %s2943 = scalar_lea.hbm %s2, %s2942
          %s2945 = sshll.u32 %s2934, 4
          %s2946 = int_to_ptr.vmem [resolvable:$true] %s2945
          %2948 = dma.vmem_to_hbm [thread:$0]  %s2946, 32, %s2943, %s2931
        $region40: #{tpu_custom_call.1} parent=27 // pred_fallthru
          _
      $region28: #{tpu_custom_call.1} parent=5 // pred_fallthru
        _
      %p2949 = scmp.le.s32.totalorder 2, %s15
      // Predicated region
      $region41: #{tpu_custom_call.1} parent=5 // pred_check
        %p2950 = pneg %p2949
      $region42: #{tpu_custom_call.1} parent=5 // pred_check_branch
        %2952 = sbr.rel (%p2950) target = $region44
      $region43: #{tpu_custom_call.1} parent=5 // pred_region
        %s2953 = ssub.s32 %s15, 2
        // Predicated region
        $region45: #{tpu_custom_call.1} parent=43 // pred_check
          %p2954 = pneg %p91
        $region46: #{tpu_custom_call.1} parent=43 // pred_check_branch
          %2956 = sbr.rel (%p2954) target = $region48
        $region47: #{tpu_custom_call.1} parent=43 // pred_region
          %s2957 = sand.u32 %s76, 1
          %s2958 = scalar_lea.sflag [#allocation4], %s2957
          %s2959 = sand.u32 %s76, 1
          %s2960 = smul.addr %s2959, 2
          %s2961 = scalar_lea.vmem [#allocation7], %s2960
          %2962 = dma.done %s2958, 32
        $region48: #{tpu_custom_call.1} parent=43 // pred_fallthru
          _
      $region44: #{tpu_custom_call.1} parent=5 // pred_fallthru
        _
    $region6: #{tpu_custom_call.1} parent=1 // loop_footer
      %s19 = sadd.s32 1, %s15
    $region7: #{tpu_custom_call.1} parent=1 // loop_footer_branch
      %14 = sbr.rel target = $region3
    $region8: #{tpu_custom_call.1} parent=1 // loop_exit
      _
    %2963 = vsyncpa [#allocation3], 1
    %s2964 = scalar_lea.sflag [#allocation3], 1
    %2965 = vsyncpa %s2964, 1
    %2966 = vsyncpa [#allocation6], 1
    %2967 = vsyncpa [#allocation4], 1
    %s2968 = scalar_lea.sflag [#allocation4], 1
    %2969 = vsyncpa %s2968, 1

</llo_original>
